<compile_context>
chip_gen: v6e
topology: v6e:2x2x1
jax: 0.10.0
libtpu: 0.0.40
codegen_flags: <defaults>
</compile_context>

<pallas_src>
import functools

import jax
import jax.numpy as jnp
from jax.experimental import pallas as pl
from jax.experimental.pallas import tpu as pltpu

HIDDEN = 64   # self.lstm_features in the PyTorch module (fixed)
CP = 128      # padded lane width of the FC output (keep stores lane-dense)


def _emotion_lstm_kernel(x_ref, wih_ref, whh_ref, b_ref, wfc_ref, bfc_ref,
                         out_ref, xw_ref, *, seq_len, batch):
    """Single-TensorCore LSTM recurrence + final Linear.

    x_ref:   (T*Bp, F)     time-major, batch-padded input, flattened over (T, Bp)
    wih_ref: (F, 4*H)      input->gate weights, gate order [i|f|o|g], native width
    whh_ref: (H, 4*H)      hidden->gate weights, same order, native width
    b_ref:   (1, 4*H)      b_ih + b_hh
    wfc_ref: (H, CP)       fc weight (output lanes zero-padded to CP)
    bfc_ref: (1, CP)       fc bias  (zero-padded to CP)
    out_ref: (Bp, CP)      padded logits (lane-dense store)
    xw_ref:  (T*Bp, 4*H)   VMEM scratch for the hoisted input projection
    """
    H = HIDDEN

    # Hoisted input projection: one batched MXU call, bias folded in.  Staged
    # through VMEM so the unrolled time loop reads 8-row slices per step
    # instead of keeping the whole projection register-resident.
    xw_ref[...] = (jnp.dot(x_ref[...], wih_ref[...],
                           preferred_element_type=jnp.float32) + b_ref[...])

    h = jnp.zeros((batch, H), jnp.float32)
    c = jnp.zeros((batch, H), jnp.float32)

    # Serial recurrence: only h @ W_hh (8,64)x(64,256) on the critical path.
    # seq_len is a compile-time constant so this fully unrolls and the LLO
    # scheduler can overlap gate math with the next step's MXU latency.
    # NOTE: default TPU matmul precision (bf16 passes); set precision=HIGHEST
    # on these dots if bit-closeness to a float32 PyTorch LSTM is required.
    for t in range(seq_len):
        gates = xw_ref[pl.ds(t * batch, batch), :] + jnp.dot(
            h, whh_ref[...], preferred_element_type=jnp.float32)   # (Bp, 4*H)
        i_g = jax.nn.sigmoid(gates[:, 0 * H:1 * H])
        f_g = jax.nn.sigmoid(gates[:, 1 * H:2 * H])
        o_g = jax.nn.sigmoid(gates[:, 2 * H:3 * H])
        g_g = jnp.tanh(gates[:, 3 * H:4 * H])
        c = f_g * c + i_g * g_g
        h = o_g * jnp.tanh(c)

    # dropout(p=0.25, training=False) == identity (eval mode).
    out_ref[...] = (jnp.dot(h, wfc_ref[...], preferred_element_type=jnp.float32)
                    + bfc_ref[...])


def prepare_params(w_ih, w_hh, b_ih, b_hh, w_fc, b_fc):
    """One-time repack of PyTorch-layout weights.  Call once, reuse per forward.

    w_ih: (4H, F), w_hh: (4H, H), b_ih/b_hh: (4H,)  -- nn.LSTM layout, gates [i,f,g,o]
    w_fc: (C, H),  b_fc: (C,)                        -- nn.Linear layout
    """
    H = HIDDEN
    C = w_fc.shape[0]

    def gsplit(a):
        return a[0 * H:1 * H], a[1 * H:2 * H], a[2 * H:3 * H], a[3 * H:4 * H]

    i_ih, f_ih, g_ih, o_ih = gsplit(w_ih.astype(jnp.float32))       # each (H, F)
    i_hh, f_hh, g_hh, o_hh = gsplit(w_hh.astype(jnp.float32))       # each (H, H)
    i_b, f_b, g_b, o_b = gsplit((b_ih + b_hh).astype(jnp.float32))  # each (H,)

    # Repack as [i | f | o | g] at native 64-lane width each (4*H = 256 lanes)
    # so sigmoid gates are contiguous and tanh(g) is last.
    wih_p = jnp.concatenate([i_ih.T, f_ih.T, o_ih.T, g_ih.T], axis=1)   # (F, 4H)
    whh_p = jnp.concatenate([i_hh.T, f_hh.T, o_hh.T, g_hh.T], axis=1)   # (H, 4H)
    b_p = jnp.concatenate([i_b, f_b, o_b, g_b]).reshape(1, 4 * H)

    wfc_p = jnp.pad(w_fc.T.astype(jnp.float32), ((0, 0), (0, CP - C)))  # (H, CP)
    bfc_p = jnp.pad(b_fc.astype(jnp.float32), (0, CP - C)).reshape(1, CP)
    return wih_p, whh_p, b_p, wfc_p, bfc_p


@functools.partial(jax.jit, static_argnames=("num_classes",))
def emotion_lstm_forward(x_btf, wih_p, whh_p, b_p, wfc_p, bfc_p, *, num_classes):
    """x_btf: (B, T, F) float32, batch_first (like PyTorch).  Returns (B, C)."""
    B, T, F = x_btf.shape
    Bp = ((B + 7) // 8) * 8                                  # pad batch to sublanes

    # (B, T, F) -> time-major, batch-padded, flattened (T*Bp, F)
    x_tbf = jnp.transpose(x_btf.astype(jnp.float32), (1, 0, 2))
    x_tbf = jnp.pad(x_tbf, ((0, 0), (0, Bp - B), (0, 0)))
    x2d = x_tbf.reshape(T * Bp, F)

    vmem = pl.BlockSpec(memory_space=pltpu.MemorySpace.VMEM)
    out_p = pl.pallas_call(
        functools.partial(_emotion_lstm_kernel, seq_len=T, batch=Bp),
        out_shape=jax.ShapeDtypeStruct((Bp, CP), jnp.float32),
        in_specs=[vmem] * 6,
        out_specs=vmem,
        scratch_shapes=[pltpu.VMEM((T * Bp, 4 * HIDDEN), jnp.float32)],
        # No grid: footprint ~0.2 MiB, latency-bound serial recurrence.
        # TODO(synk): if Bp grows beyond 8, add a leading "parallel" batch-tile
        # grid axis so v7x's second TensorCore is used (weights are read-only).
        compiler_params=pltpu.CompilerParams(dimension_semantics=()),
    )(x2d, wih_p, whh_p, b_p, wfc_p, bfc_p)

    return out_p[:B, :num_classes]


def _reference_forward(x_btf, w_ih, w_hh, b_ih, b_hh, w_fc, b_fc):
    """Pure-JAX reference mirroring torch.nn.LSTM + Linear (eval mode)."""
    B, T, F = x_btf.shape
    H = HIDDEN
    h = jnp.zeros((B, H), jnp.float32)
    c = jnp.zeros((B, H), jnp.float32)
    for t in range(T):
        gates = x_btf[:, t, :] @ w_ih.T + h @ w_hh.T + b_ih + b_hh
        i_g = jax.nn.sigmoid(gates[:, 0 * H:1 * H])
        f_g = jax.nn.sigmoid(gates[:, 1 * H:2 * H])
        g_g = jnp.tanh(gates[:, 2 * H:3 * H])
        o_g = jax.nn.sigmoid(gates[:, 3 * H:4 * H])
        c = f_g * c + i_g * g_g
        h = o_g * jnp.tanh(c)
    return h @ w_fc.T + b_fc


if __name__ == "__main__":
    # Small shapes consistent with the module: num_features=32, num_classes=8,
    # batch=2, seq_len=8, hidden=64 (fixed inside the module).
    B, T, F, C, H = 2, 8, 32, 8, HIDDEN

    key = jax.random.PRNGKey(0)
    kx, k1, k2, k3, k4, k5, k6 = jax.random.split(key, 7)

    x = jax.random.normal(kx, (B, T, F), dtype=jnp.float32)

    # Deterministic PyTorch-style uniform(-1/sqrt(H), 1/sqrt(H)) init.
    bound = 1.0 / jnp.sqrt(jnp.float32(H))
    w_ih = jax.random.uniform(k1, (4 * H, F), jnp.float32, -bound, bound)
    w_hh = jax.random.uniform(k2, (4 * H, H), jnp.float32, -bound, bound)
    b_ih = jax.random.uniform(k3, (4 * H,), jnp.float32, -bound, bound)
    b_hh = jax.random.uniform(k4, (4 * H,), jnp.float32, -bound, bound)
    w_fc = jax.random.uniform(k5, (C, H), jnp.float32, -bound, bound)
    b_fc = jax.random.uniform(k6, (C,), jnp.float32, -bound, bound)

    # One-time weight repack (off the per-inference path).
    params = prepare_params(w_ih, w_hh, b_ih, b_hh, w_fc, b_fc)
    params = tuple(jax.block_until_ready(p) for p in params)

    out = emotion_lstm_forward(x, *params, num_classes=C)
    out = jax.block_until_ready(out)

    ref = _reference_forward(x, w_ih, w_hh, b_ih, b_hh, w_fc, b_fc)
    assert out.shape == (B, C), out.shape
    assert jnp.allclose(out, ref, atol=1e-4, rtol=1e-4), (
        float(jnp.max(jnp.abs(out - ref)))
    )
    print("KERNEL_OK")
</pallas_src>

<mosaic_0001>
module attributes {stable_mosaic.version = 11 : i64} {
  func.func @_emotion_lstm_kernel(%arg0: memref<64x32xf32, #tpu.memory_space<vmem>>, %arg1: memref<32x256xf32, #tpu.memory_space<vmem>>, %arg2: memref<64x256xf32, #tpu.memory_space<vmem>>, %arg3: memref<1x256xf32, #tpu.memory_space<vmem>>, %arg4: memref<64x128xf32, #tpu.memory_space<vmem>>, %arg5: memref<1x128xf32, #tpu.memory_space<vmem>>, %arg6: memref<8x128xf32, #tpu.memory_space<vmem>>, %arg7: memref<64x256xf32, #tpu.memory_space<vmem>>) attributes {dimension_semantics = [], scalar_prefetch = 0 : i64, scratch_operands = 1 : i64, tpu.core_type = #tpu.core_type<tc>} {
    %c0 = arith.constant 0 : index
    %c0_0 = arith.constant 0 : index
    %0 = vector.load %arg0[%c0, %c0_0] : memref<64x32xf32, #tpu.memory_space<vmem>>, vector<64x32xf32>
    %c0_1 = arith.constant 0 : index
    %c0_2 = arith.constant 0 : index
    %1 = vector.load %arg1[%c0_1, %c0_2] : memref<32x256xf32, #tpu.memory_space<vmem>>, vector<32x256xf32>
    %cst = arith.constant dense<0.000000e+00> : vector<64x256xf32>
    %2 = tpu.matmul %0, %1, %cst {dimension_numbers = #tpu.dot_dimension_numbers<[1], [0], [0], [1], [0, 0, 1, 1], [], []>} : vector<64x32xf32>, vector<32x256xf32>, vector<64x256xf32> -> vector<64x256xf32>
    %c0_3 = arith.constant 0 : index
    %c0_4 = arith.constant 0 : index
    %3 = vector.load %arg3[%c0_3, %c0_4] : memref<1x256xf32, #tpu.memory_space<vmem>>, vector<1x256xf32>
    %4 = vector.broadcast %3 : vector<1x256xf32> to vector<64x256xf32>
    %5 = arith.addf %2, %4 : vector<64x256xf32>
    %c0_5 = arith.constant 0 : index
    %c0_6 = arith.constant 0 : index
    %6 = vector.load %arg7[%c0_5, %c0_6] : memref<64x256xf32, #tpu.memory_space<vmem>>, vector<64x256xf32>
    tpu.vector_store %arg7[%c0_5, %c0_6], %5 {strides = array<i32>} : memref<64x256xf32, #tpu.memory_space<vmem>>, vector<64x256xf32>,
    %cst_7 = arith.constant 0.000000e+00 : f32
    %7 = vector.broadcast %cst_7 : f32 to vector<8x64xf32>
    %cst_8 = arith.constant 0.000000e+00 : f32
    %8 = vector.broadcast %cst_8 : f32 to vector<8x64xf32>
    %c0_9 = arith.constant 0 : index
    %c0_10 = arith.constant 0 : index
    %9 = vector.load %arg7[%c0_9, %c0_10] : memref<64x256xf32, #tpu.memory_space<vmem>>, vector<8x256xf32>
    %c0_11 = arith.constant 0 : index
    %c0_12 = arith.constant 0 : index
    %10 = vector.load %arg2[%c0_11, %c0_12] : memref<64x256xf32, #tpu.memory_space<vmem>>, vector<64x256xf32>
    %cst_13 = arith.constant dense<0.000000e+00> : vector<8x256xf32>
    %11 = tpu.matmul %7, %10, %cst_13 {dimension_numbers = #tpu.dot_dimension_numbers<[1], [0], [0], [1], [0, 0, 1, 1], [], []>} : vector<8x64xf32>, vector<64x256xf32>, vector<8x256xf32> -> vector<8x256xf32>
    %12 = arith.addf %9, %11 : vector<8x256xf32>
    %13 = vector.extract_strided_slice %12 {offsets = [0, 0], sizes = [8, 64], strides = [1, 1]} : vector<8x256xf32> to vector<8x64xf32>
    %14 = arith.negf %13 : vector<8x64xf32>
    %15 = math.exp %14 : vector<8x64xf32>
    %cst_14 = arith.constant 1.000000e+00 : f32
    %16 = vector.broadcast %cst_14 : f32 to vector<8x64xf32>
    %17 = arith.addf %16, %15 : vector<8x64xf32>
    %18 = arith.divf %16, %17 : vector<8x64xf32>
    %19 = vector.extract_strided_slice %12 {offsets = [0, 64], sizes = [8, 64], strides = [1, 1]} : vector<8x256xf32> to vector<8x64xf32>
    %20 = arith.negf %19 : vector<8x64xf32>
    %21 = math.exp %20 : vector<8x64xf32>
    %cst_15 = arith.constant 1.000000e+00 : f32
    %22 = vector.broadcast %cst_15 : f32 to vector<8x64xf32>
    %23 = arith.addf %22, %21 : vector<8x64xf32>
    %24 = arith.divf %22, %23 : vector<8x64xf32>
    %25 = vector.extract_strided_slice %12 {offsets = [0, 128], sizes = [8, 64], strides = [1, 1]} : vector<8x256xf32> to vector<8x64xf32>
    %26 = arith.negf %25 : vector<8x64xf32>
    %27 = math.exp %26 : vector<8x64xf32>
    %cst_16 = arith.constant 1.000000e+00 : f32
    %28 = vector.broadcast %cst_16 : f32 to vector<8x64xf32>
    %29 = arith.addf %28, %27 : vector<8x64xf32>
    %30 = arith.divf %28, %29 : vector<8x64xf32>
    %31 = vector.extract_strided_slice %12 {offsets = [0, 192], sizes = [8, 64], strides = [1, 1]} : vector<8x256xf32> to vector<8x64xf32>
    %32 = math.tanh %31 : vector<8x64xf32>
    %33 = arith.mulf %24, %8 : vector<8x64xf32>
    %34 = arith.mulf %18, %32 : vector<8x64xf32>
    %35 = arith.addf %33, %34 : vector<8x64xf32>
    %36 = math.tanh %35 : vector<8x64xf32>
    %37 = arith.mulf %30, %36 : vector<8x64xf32>
    %c8 = arith.constant 8 : index
    %c0_17 = arith.constant 0 : index
    %38 = vector.load %arg7[%c8, %c0_17] : memref<64x256xf32, #tpu.memory_space<vmem>>, vector<8x256xf32>
    %c0_18 = arith.constant 0 : index
    %c0_19 = arith.constant 0 : index
    %39 = vector.load %arg2[%c0_18, %c0_19] : memref<64x256xf32, #tpu.memory_space<vmem>>, vector<64x256xf32>
    %cst_20 = arith.constant dense<0.000000e+00> : vector<8x256xf32>
    %40 = tpu.matmul %37, %39, %cst_20 {dimension_numbers = #tpu.dot_dimension_numbers<[1], [0], [0], [1], [0, 0, 1, 1], [], []>} : vector<8x64xf32>, vector<64x256xf32>, vector<8x256xf32> -> vector<8x256xf32>
    %41 = arith.addf %38, %40 : vector<8x256xf32>
    %42 = vector.extract_strided_slice %41 {offsets = [0, 0], sizes = [8, 64], strides = [1, 1]} : vector<8x256xf32> to vector<8x64xf32>
    %43 = arith.negf %42 : vector<8x64xf32>
    %44 = math.exp %43 : vector<8x64xf32>
    %cst_21 = arith.constant 1.000000e+00 : f32
    %45 = vector.broadcast %cst_21 : f32 to vector<8x64xf32>
    %46 = arith.addf %45, %44 : vector<8x64xf32>
    %47 = arith.divf %45, %46 : vector<8x64xf32>
    %48 = vector.extract_strided_slice %41 {offsets = [0, 64], sizes = [8, 64], strides = [1, 1]} : vector<8x256xf32> to vector<8x64xf32>
    %49 = arith.negf %48 : vector<8x64xf32>
    %50 = math.exp %49 : vector<8x64xf32>
    %cst_22 = arith.constant 1.000000e+00 : f32
    %51 = vector.broadcast %cst_22 : f32 to vector<8x64xf32>
    %52 = arith.addf %51, %50 : vector<8x64xf32>
    %53 = arith.divf %51, %52 : vector<8x64xf32>
    %54 = vector.extract_strided_slice %41 {offsets = [0, 128], sizes = [8, 64], strides = [1, 1]} : vector<8x256xf32> to vector<8x64xf32>
    %55 = arith.negf %54 : vector<8x64xf32>
    %56 = math.exp %55 : vector<8x64xf32>
    %cst_23 = arith.constant 1.000000e+00 : f32
    %57 = vector.broadcast %cst_23 : f32 to vector<8x64xf32>
    %58 = arith.addf %57, %56 : vector<8x64xf32>
    %59 = arith.divf %57, %58 : vector<8x64xf32>
    %60 = vector.extract_strided_slice %41 {offsets = [0, 192], sizes = [8, 64], strides = [1, 1]} : vector<8x256xf32> to vector<8x64xf32>
    %61 = math.tanh %60 : vector<8x64xf32>
    %62 = arith.mulf %53, %35 : vector<8x64xf32>
    %63 = arith.mulf %47, %61 : vector<8x64xf32>
    %64 = arith.addf %62, %63 : vector<8x64xf32>
    %65 = math.tanh %64 : vector<8x64xf32>
    %66 = arith.mulf %59, %65 : vector<8x64xf32>
    %c16 = arith.constant 16 : index
    %c0_24 = arith.constant 0 : index
    %67 = vector.load %arg7[%c16, %c0_24] : memref<64x256xf32, #tpu.memory_space<vmem>>, vector<8x256xf32>
    %c0_25 = arith.constant 0 : index
    %c0_26 = arith.constant 0 : index
    %68 = vector.load %arg2[%c0_25, %c0_26] : memref<64x256xf32, #tpu.memory_space<vmem>>, vector<64x256xf32>
    %cst_27 = arith.constant dense<0.000000e+00> : vector<8x256xf32>
    %69 = tpu.matmul %66, %68, %cst_27 {dimension_numbers = #tpu.dot_dimension_numbers<[1], [0], [0], [1], [0, 0, 1, 1], [], []>} : vector<8x64xf32>, vector<64x256xf32>, vector<8x256xf32> -> vector<8x256xf32>
    %70 = arith.addf %67, %69 : vector<8x256xf32>
    %71 = vector.extract_strided_slice %70 {offsets = [0, 0], sizes = [8, 64], strides = [1, 1]} : vector<8x256xf32> to vector<8x64xf32>
    %72 = arith.negf %71 : vector<8x64xf32>
    %73 = math.exp %72 : vector<8x64xf32>
    %cst_28 = arith.constant 1.000000e+00 : f32
    %74 = vector.broadcast %cst_28 : f32 to vector<8x64xf32>
    %75 = arith.addf %74, %73 : vector<8x64xf32>
    %76 = arith.divf %74, %75 : vector<8x64xf32>
    %77 = vector.extract_strided_slice %70 {offsets = [0, 64], sizes = [8, 64], strides = [1, 1]} : vector<8x256xf32> to vector<8x64xf32>
    %78 = arith.negf %77 : vector<8x64xf32>
    %79 = math.exp %78 : vector<8x64xf32>
    %cst_29 = arith.constant 1.000000e+00 : f32
    %80 = vector.broadcast %cst_29 : f32 to vector<8x64xf32>
    %81 = arith.addf %80, %79 : vector<8x64xf32>
    %82 = arith.divf %80, %81 : vector<8x64xf32>
    %83 = vector.extract_strided_slice %70 {offsets = [0, 128], sizes = [8, 64], strides = [1, 1]} : vector<8x256xf32> to vector<8x64xf32>
    %84 = arith.negf %83 : vector<8x64xf32>
    %85 = math.exp %84 : vector<8x64xf32>
    %cst_30 = arith.constant 1.000000e+00 : f32
    %86 = vector.broadcast %cst_30 : f32 to vector<8x64xf32>
    %87 = arith.addf %86, %85 : vector<8x64xf32>
    %88 = arith.divf %86, %87 : vector<8x64xf32>
    %89 = vector.extract_strided_slice %70 {offsets = [0, 192], sizes = [8, 64], strides = [1, 1]} : vector<8x256xf32> to vector<8x64xf32>
    %90 = math.tanh %89 : vector<8x64xf32>
    %91 = arith.mulf %82, %64 : vector<8x64xf32>
    %92 = arith.mulf %76, %90 : vector<8x64xf32>
    %93 = arith.addf %91, %92 : vector<8x64xf32>
    %94 = math.tanh %93 : vector<8x64xf32>
    %95 = arith.mulf %88, %94 : vector<8x64xf32>
    %c24 = arith.constant 24 : index
    %c0_31 = arith.constant 0 : index
    %96 = vector.load %arg7[%c24, %c0_31] : memref<64x256xf32, #tpu.memory_space<vmem>>, vector<8x256xf32>
    %c0_32 = arith.constant 0 : index
    %c0_33 = arith.constant 0 : index
    %97 = vector.load %arg2[%c0_32, %c0_33] : memref<64x256xf32, #tpu.memory_space<vmem>>, vector<64x256xf32>
    %cst_34 = arith.constant dense<0.000000e+00> : vector<8x256xf32>
    %98 = tpu.matmul %95, %97, %cst_34 {dimension_numbers = #tpu.dot_dimension_numbers<[1], [0], [0], [1], [0, 0, 1, 1], [], []>} : vector<8x64xf32>, vector<64x256xf32>, vector<8x256xf32> -> vector<8x256xf32>
    %99 = arith.addf %96, %98 : vector<8x256xf32>
    %100 = vector.extract_strided_slice %99 {offsets = [0, 0], sizes = [8, 64], strides = [1, 1]} : vector<8x256xf32> to vector<8x64xf32>
    %101 = arith.negf %100 : vector<8x64xf32>
    %102 = math.exp %101 : vector<8x64xf32>
    %cst_35 = arith.constant 1.000000e+00 : f32
    %103 = vector.broadcast %cst_35 : f32 to vector<8x64xf32>
    %104 = arith.addf %103, %102 : vector<8x64xf32>
    %105 = arith.divf %103, %104 : vector<8x64xf32>
    %106 = vector.extract_strided_slice %99 {offsets = [0, 64], sizes = [8, 64], strides = [1, 1]} : vector<8x256xf32> to vector<8x64xf32>
    %107 = arith.negf %106 : vector<8x64xf32>
    %108 = math.exp %107 : vector<8x64xf32>
    %cst_36 = arith.constant 1.000000e+00 : f32
    %109 = vector.broadcast %cst_36 : f32 to vector<8x64xf32>
    %110 = arith.addf %109, %108 : vector<8x64xf32>
    %111 = arith.divf %109, %110 : vector<8x64xf32>
    %112 = vector.extract_strided_slice %99 {offsets = [0, 128], sizes = [8, 64], strides = [1, 1]} : vector<8x256xf32> to vector<8x64xf32>
    %113 = arith.negf %112 : vector<8x64xf32>
    %114 = math.exp %113 : vector<8x64xf32>
    %cst_37 = arith.constant 1.000000e+00 : f32
    %115 = vector.broadcast %cst_37 : f32 to vector<8x64xf32>
    %116 = arith.addf %115, %114 : vector<8x64xf32>
    %117 = arith.divf %115, %116 : vector<8x64xf32>
    %118 = vector.extract_strided_slice %99 {offsets = [0, 192], sizes = [8, 64], strides = [1, 1]} : vector<8x256xf32> to vector<8x64xf32>
    %119 = math.tanh %118 : vector<8x64xf32>
    %120 = arith.mulf %111, %93 : vector<8x64xf32>
    %121 = arith.mulf %105, %119 : vector<8x64xf32>
    %122 = arith.addf %120, %121 : vector<8x64xf32>
    %123 = math.tanh %122 : vector<8x64xf32>
    %124 = arith.mulf %117, %123 : vector<8x64xf32>
    %c32 = arith.constant 32 : index
    %c0_38 = arith.constant 0 : index
    %125 = vector.load %arg7[%c32, %c0_38] : memref<64x256xf32, #tpu.memory_space<vmem>>, vector<8x256xf32>
    %c0_39 = arith.constant 0 : index
    %c0_40 = arith.constant 0 : index
    %126 = vector.load %arg2[%c0_39, %c0_40] : memref<64x256xf32, #tpu.memory_space<vmem>>, vector<64x256xf32>
    %cst_41 = arith.constant dense<0.000000e+00> : vector<8x256xf32>
    %127 = tpu.matmul %124, %126, %cst_41 {dimension_numbers = #tpu.dot_dimension_numbers<[1], [0], [0], [1], [0, 0, 1, 1], [], []>} : vector<8x64xf32>, vector<64x256xf32>, vector<8x256xf32> -> vector<8x256xf32>
    %128 = arith.addf %125, %127 : vector<8x256xf32>
    %129 = vector.extract_strided_slice %128 {offsets = [0, 0], sizes = [8, 64], strides = [1, 1]} : vector<8x256xf32> to vector<8x64xf32>
    %130 = arith.negf %129 : vector<8x64xf32>
    %131 = math.exp %130 : vector<8x64xf32>
    %cst_42 = arith.constant 1.000000e+00 : f32
    %132 = vector.broadcast %cst_42 : f32 to vector<8x64xf32>
    %133 = arith.addf %132, %131 : vector<8x64xf32>
    %134 = arith.divf %132, %133 : vector<8x64xf32>
    %135 = vector.extract_strided_slice %128 {offsets = [0, 64], sizes = [8, 64], strides = [1, 1]} : vector<8x256xf32> to vector<8x64xf32>
    %136 = arith.negf %135 : vector<8x64xf32>
    %137 = math.exp %136 : vector<8x64xf32>
    %cst_43 = arith.constant 1.000000e+00 : f32
    %138 = vector.broadcast %cst_43 : f32 to vector<8x64xf32>
    %139 = arith.addf %138, %137 : vector<8x64xf32>
    %140 = arith.divf %138, %139 : vector<8x64xf32>
    %141 = vector.extract_strided_slice %128 {offsets = [0, 128], sizes = [8, 64], strides = [1, 1]} : vector<8x256xf32> to vector<8x64xf32>
    %142 = arith.negf %141 : vector<8x64xf32>
    %143 = math.exp %142 : vector<8x64xf32>
    %cst_44 = arith.constant 1.000000e+00 : f32
    %144 = vector.broadcast %cst_44 : f32 to vector<8x64xf32>
    %145 = arith.addf %144, %143 : vector<8x64xf32>
    %146 = arith.divf %144, %145 : vector<8x64xf32>
    %147 = vector.extract_strided_slice %128 {offsets = [0, 192], sizes = [8, 64], strides = [1, 1]} : vector<8x256xf32> to vector<8x64xf32>
    %148 = math.tanh %147 : vector<8x64xf32>
    %149 = arith.mulf %140, %122 : vector<8x64xf32>
    %150 = arith.mulf %134, %148 : vector<8x64xf32>
    %151 = arith.addf %149, %150 : vector<8x64xf32>
    %152 = math.tanh %151 : vector<8x64xf32>
    %153 = arith.mulf %146, %152 : vector<8x64xf32>
    %c40 = arith.constant 40 : index
    %c0_45 = arith.constant 0 : index
    %154 = vector.load %arg7[%c40, %c0_45] : memref<64x256xf32, #tpu.memory_space<vmem>>, vector<8x256xf32>
    %c0_46 = arith.constant 0 : index
    %c0_47 = arith.constant 0 : index
    %155 = vector.load %arg2[%c0_46, %c0_47] : memref<64x256xf32, #tpu.memory_space<vmem>>, vector<64x256xf32>
    %cst_48 = arith.constant dense<0.000000e+00> : vector<8x256xf32>
    %156 = tpu.matmul %153, %155, %cst_48 {dimension_numbers = #tpu.dot_dimension_numbers<[1], [0], [0], [1], [0, 0, 1, 1], [], []>} : vector<8x64xf32>, vector<64x256xf32>, vector<8x256xf32> -> vector<8x256xf32>
    %157 = arith.addf %154, %156 : vector<8x256xf32>
    %158 = vector.extract_strided_slice %157 {offsets = [0, 0], sizes = [8, 64], strides = [1, 1]} : vector<8x256xf32> to vector<8x64xf32>
    %159 = arith.negf %158 : vector<8x64xf32>
    %160 = math.exp %159 : vector<8x64xf32>
    %cst_49 = arith.constant 1.000000e+00 : f32
    %161 = vector.broadcast %cst_49 : f32 to vector<8x64xf32>
    %162 = arith.addf %161, %160 : vector<8x64xf32>
    %163 = arith.divf %161, %162 : vector<8x64xf32>
    %164 = vector.extract_strided_slice %157 {offsets = [0, 64], sizes = [8, 64], strides = [1, 1]} : vector<8x256xf32> to vector<8x64xf32>
    %165 = arith.negf %164 : vector<8x64xf32>
    %166 = math.exp %165 : vector<8x64xf32>
    %cst_50 = arith.constant 1.000000e+00 : f32
    %167 = vector.broadcast %cst_50 : f32 to vector<8x64xf32>
    %168 = arith.addf %167, %166 : vector<8x64xf32>
    %169 = arith.divf %167, %168 : vector<8x64xf32>
    %170 = vector.extract_strided_slice %157 {offsets = [0, 128], sizes = [8, 64], strides = [1, 1]} : vector<8x256xf32> to vector<8x64xf32>
    %171 = arith.negf %170 : vector<8x64xf32>
    %172 = math.exp %171 : vector<8x64xf32>
    %cst_51 = arith.constant 1.000000e+00 : f32
    %173 = vector.broadcast %cst_51 : f32 to vector<8x64xf32>
    %174 = arith.addf %173, %172 : vector<8x64xf32>
    %175 = arith.divf %173, %174 : vector<8x64xf32>
    %176 = vector.extract_strided_slice %157 {offsets = [0, 192], sizes = [8, 64], strides = [1, 1]} : vector<8x256xf32> to vector<8x64xf32>
    %177 = math.tanh %176 : vector<8x64xf32>
    %178 = arith.mulf %169, %151 : vector<8x64xf32>
    %179 = arith.mulf %163, %177 : vector<8x64xf32>
    %180 = arith.addf %178, %179 : vector<8x64xf32>
    %181 = math.tanh %180 : vector<8x64xf32>
    %182 = arith.mulf %175, %181 : vector<8x64xf32>
    %c48 = arith.constant 48 : index
    %c0_52 = arith.constant 0 : index
    %183 = vector.load %arg7[%c48, %c0_52] : memref<64x256xf32, #tpu.memory_space<vmem>>, vector<8x256xf32>
    %c0_53 = arith.constant 0 : index
    %c0_54 = arith.constant 0 : index
    %184 = vector.load %arg2[%c0_53, %c0_54] : memref<64x256xf32, #tpu.memory_space<vmem>>, vector<64x256xf32>
    %cst_55 = arith.constant dense<0.000000e+00> : vector<8x256xf32>
    %185 = tpu.matmul %182, %184, %cst_55 {dimension_numbers = #tpu.dot_dimension_numbers<[1], [0], [0], [1], [0, 0, 1, 1], [], []>} : vector<8x64xf32>, vector<64x256xf32>, vector<8x256xf32> -> vector<8x256xf32>
    %186 = arith.addf %183, %185 : vector<8x256xf32>
    %187 = vector.extract_strided_slice %186 {offsets = [0, 0], sizes = [8, 64], strides = [1, 1]} : vector<8x256xf32> to vector<8x64xf32>
    %188 = arith.negf %187 : vector<8x64xf32>
    %189 = math.exp %188 : vector<8x64xf32>
    %cst_56 = arith.constant 1.000000e+00 : f32
    %190 = vector.broadcast %cst_56 : f32 to vector<8x64xf32>
    %191 = arith.addf %190, %189 : vector<8x64xf32>
    %192 = arith.divf %190, %191 : vector<8x64xf32>
    %193 = vector.extract_strided_slice %186 {offsets = [0, 64], sizes = [8, 64], strides = [1, 1]} : vector<8x256xf32> to vector<8x64xf32>
    %194 = arith.negf %193 : vector<8x64xf32>
    %195 = math.exp %194 : vector<8x64xf32>
    %cst_57 = arith.constant 1.000000e+00 : f32
    %196 = vector.broadcast %cst_57 : f32 to vector<8x64xf32>
    %197 = arith.addf %196, %195 : vector<8x64xf32>
    %198 = arith.divf %196, %197 : vector<8x64xf32>
    %199 = vector.extract_strided_slice %186 {offsets = [0, 128], sizes = [8, 64], strides = [1, 1]} : vector<8x256xf32> to vector<8x64xf32>
    %200 = arith.negf %199 : vector<8x64xf32>
    %201 = math.exp %200 : vector<8x64xf32>
    %cst_58 = arith.constant 1.000000e+00 : f32
    %202 = vector.broadcast %cst_58 : f32 to vector<8x64xf32>
    %203 = arith.addf %202, %201 : vector<8x64xf32>
    %204 = arith.divf %202, %203 : vector<8x64xf32>
    %205 = vector.extract_strided_slice %186 {offsets = [0, 192], sizes = [8, 64], strides = [1, 1]} : vector<8x256xf32> to vector<8x64xf32>
    %206 = math.tanh %205 : vector<8x64xf32>
    %207 = arith.mulf %198, %180 : vector<8x64xf32>
    %208 = arith.mulf %192, %206 : vector<8x64xf32>
    %209 = arith.addf %207, %208 : vector<8x64xf32>
    %210 = math.tanh %209 : vector<8x64xf32>
    %211 = arith.mulf %204, %210 : vector<8x64xf32>
    %c56 = arith.constant 56 : index
    %c0_59 = arith.constant 0 : index
    %212 = vector.load %arg7[%c56, %c0_59] : memref<64x256xf32, #tpu.memory_space<vmem>>, vector<8x256xf32>
    %c0_60 = arith.constant 0 : index
    %c0_61 = arith.constant 0 : index
    %213 = vector.load %arg2[%c0_60, %c0_61] : memref<64x256xf32, #tpu.memory_space<vmem>>, vector<64x256xf32>
    %cst_62 = arith.constant dense<0.000000e+00> : vector<8x256xf32>
    %214 = tpu.matmul %211, %213, %cst_62 {dimension_numbers = #tpu.dot_dimension_numbers<[1], [0], [0], [1], [0, 0, 1, 1], [], []>} : vector<8x64xf32>, vector<64x256xf32>, vector<8x256xf32> -> vector<8x256xf32>
    %215 = arith.addf %212, %214 : vector<8x256xf32>
    %216 = vector.extract_strided_slice %215 {offsets = [0, 0], sizes = [8, 64], strides = [1, 1]} : vector<8x256xf32> to vector<8x64xf32>
    %217 = arith.negf %216 : vector<8x64xf32>
    %218 = math.exp %217 : vector<8x64xf32>
    %cst_63 = arith.constant 1.000000e+00 : f32
    %219 = vector.broadcast %cst_63 : f32 to vector<8x64xf32>
    %220 = arith.addf %219, %218 : vector<8x64xf32>
    %221 = arith.divf %219, %220 : vector<8x64xf32>
    %222 = vector.extract_strided_slice %215 {offsets = [0, 64], sizes = [8, 64], strides = [1, 1]} : vector<8x256xf32> to vector<8x64xf32>
    %223 = arith.negf %222 : vector<8x64xf32>
    %224 = math.exp %223 : vector<8x64xf32>
    %cst_64 = arith.constant 1.000000e+00 : f32
    %225 = vector.broadcast %cst_64 : f32 to vector<8x64xf32>
    %226 = arith.addf %225, %224 : vector<8x64xf32>
    %227 = arith.divf %225, %226 : vector<8x64xf32>
    %228 = vector.extract_strided_slice %215 {offsets = [0, 128], sizes = [8, 64], strides = [1, 1]} : vector<8x256xf32> to vector<8x64xf32>
    %229 = arith.negf %228 : vector<8x64xf32>
    %230 = math.exp %229 : vector<8x64xf32>
    %cst_65 = arith.constant 1.000000e+00 : f32
    %231 = vector.broadcast %cst_65 : f32 to vector<8x64xf32>
    %232 = arith.addf %231, %230 : vector<8x64xf32>
    %233 = arith.divf %231, %232 : vector<8x64xf32>
    %234 = vector.extract_strided_slice %215 {offsets = [0, 192], sizes = [8, 64], strides = [1, 1]} : vector<8x256xf32> to vector<8x64xf32>
    %235 = math.tanh %234 : vector<8x64xf32>
    %236 = arith.mulf %227, %209 : vector<8x64xf32>
    %237 = arith.mulf %221, %235 : vector<8x64xf32>
    %238 = arith.addf %236, %237 : vector<8x64xf32>
    %239 = math.tanh %238 : vector<8x64xf32>
    %240 = arith.mulf %233, %239 : vector<8x64xf32>
    %c0_66 = arith.constant 0 : index
    %c0_67 = arith.constant 0 : index
    %241 = vector.load %arg4[%c0_66, %c0_67] : memref<64x128xf32, #tpu.memory_space<vmem>>, vector<64x128xf32>
    %cst_68 = arith.constant dense<0.000000e+00> : vector<8x128xf32>
    %242 = tpu.matmul %240, %241, %cst_68 {dimension_numbers = #tpu.dot_dimension_numbers<[1], [0], [0], [1], [0, 0, 1, 1], [], []>} : vector<8x64xf32>, vector<64x128xf32>, vector<8x128xf32> -> vector<8x128xf32>
    %c0_69 = arith.constant 0 : index
    %c0_70 = arith.constant 0 : index
    %243 = vector.load %arg5[%c0_69, %c0_70] : memref<1x128xf32, #tpu.memory_space<vmem>>, vector<1x128xf32>
    %244 = vector.broadcast %243 : vector<1x128xf32> to vector<8x128xf32>
    %245 = arith.addf %242, %244 : vector<8x128xf32>
    %c0_71 = arith.constant 0 : index
    %c0_72 = arith.constant 0 : index
    %246 = vector.load %arg6[%c0_71, %c0_72] : memref<8x128xf32, #tpu.memory_space<vmem>>, vector<8x128xf32>
    tpu.vector_store %arg6[%c0_71, %c0_72], %245 {strides = array<i32>} : memref<8x128xf32, #tpu.memory_space<vmem>>, vector<8x128xf32>,
    return
  }
}

</mosaic_0001>

<llo_original>
// kernel: emotion_lstm_forward.1
$region0: #{emotion_lstm_forward.1}
  #allocation0 [shape = 'u32[]', space=smem, size = 0x4, offset = 0x4, fixed_abs, tag = 'smem constant byte address 0x4 - core index']
  #allocation1 [shape = 'u32[144,128]{1,0:T(1,128)}', space=vmem, size = 0x12000, scoped, tag = 'internal scratch']
  #allocation2 [shape = 'f32[64,256]{1,0:T(8,128)}', space=vmem, size = 0x10000, scoped, tag = 'scratch operand']
  %s0 = inlined_call_operand.vmem [shape: f32[64,32], index: 0, kind: input, shape index: {}]
  %s1 = inlined_call_operand.vmem [shape: f32[32,256], index: 1, kind: input, shape index: {}]
  %s2 = inlined_call_operand.hbm [shape: f32[64,256], index: 2, kind: input, shape index: {}]
  %s3 = inlined_call_operand.vmem [shape: f32[1,256], index: 3, kind: input, shape index: {}]
  %s4 = inlined_call_operand.hbm [shape: f32[64,128], index: 4, kind: input, shape index: {}]
  %s5 = inlined_call_operand.vmem [shape: f32[1,128], index: 5, kind: input, shape index: {}]
  %s6 = inlined_call_operand.vmem [shape: f32[8,128], index: 6, kind: output, shape index: {}]
  %s7 = sld [smem:[#allocation0]]
  $region42: #{emotion_lstm_forward.1} parent=0
    _
  %s9 = ssub.s32 1, %s7
  %s10 = scalar_select 0, %s9, %s7
  $region1: #{emotion_lstm_forward.1} parent=0
    #allocation3 [shape = 'u8[65536]{0}', space=vmem, size = 0x10000, scoped, tag = 'input window, operand 2, single buffered']
    #allocation4 [shape = 's32[1]{0}', space=sflag, size = 0x4, scoped, tag = 'scoped memory for emotion_lstm_forward.1']
    #allocation5 [shape = 'u8[32768]{0}', space=vmem, size = 0x8000, scoped, tag = 'input window, operand 4, single buffered']
    #allocation6 [shape = 's32[1]{0}', space=sflag, size = 0x4, scoped, tag = 'scoped memory for emotion_lstm_forward.1']
    %11 = vsyncpa [#allocation4], 0
    %12 = vsyncpa [#allocation6], 0
    // Predicated region
    $region2: #{emotion_lstm_forward.1} parent=1 // pred_check
      _
    $region3: #{emotion_lstm_forward.1} parent=1 // pred_check_branch
      %14 = sbr.rel (0) target = $region5
    $region4: #{emotion_lstm_forward.1} parent=1 // pred_region
      _
    $region5: #{emotion_lstm_forward.1} parent=1 // pred_fallthru
      _
    // Predicated region
    $region6: #{emotion_lstm_forward.1} parent=1 // pred_check
      _
    $region7: #{emotion_lstm_forward.1} parent=1 // pred_check_branch
      %16 = sbr.rel (0) target = $region9
    $region8: #{emotion_lstm_forward.1} parent=1 // pred_region
      _
    $region9: #{emotion_lstm_forward.1} parent=1 // pred_fallthru
      _
    // Predicated region
    $region10: #{emotion_lstm_forward.1} parent=1 // pred_check
      _
    $region11: #{emotion_lstm_forward.1} parent=1 // pred_check_branch
      %18 = sbr.rel (0) target = $region13
    $region12: #{emotion_lstm_forward.1} parent=1 // pred_region
      %s20 = ssub.s32 2048, 2048
      %21 = vsyncadd [#allocation4], %s20
      %s22 = sshll.u32 [#allocation3], 4
      %s23 = int_to_ptr.vmem [resolvable:$true] %s22
      %28 = dma.hbm_to_vmem [thread:$0]  %s2, 2048, %s23, [#allocation4], 256, 256, 16
    $region13: #{emotion_lstm_forward.1} parent=1 // pred_fallthru
      _
    // Predicated region
    $region14: #{emotion_lstm_forward.1} parent=1 // pred_check
      _
    $region15: #{emotion_lstm_forward.1} parent=1 // pred_check_branch
      %30 = sbr.rel (0) target = $region17
    $region16: #{emotion_lstm_forward.1} parent=1 // pred_region
      _
    $region17: #{emotion_lstm_forward.1} parent=1 // pred_fallthru
      _
    // Predicated region
    $region18: #{emotion_lstm_forward.1} parent=1 // pred_check
      _
    $region19: #{emotion_lstm_forward.1} parent=1 // pred_check_branch
      %32 = sbr.rel (0) target = $region21
    $region20: #{emotion_lstm_forward.1} parent=1 // pred_region
      %s34 = ssub.s32 1024, 1024
      %35 = vsyncadd [#allocation6], %s34
      %s36 = sshll.u32 [#allocation5], 4
      %s37 = int_to_ptr.vmem [resolvable:$true] %s36
      %42 = dma.hbm_to_vmem [thread:$0]  %s4, 1024, %s37, [#allocation6], 128, 128, 8
    $region21: #{emotion_lstm_forward.1} parent=1 // pred_fallthru
      _
    // Predicated region
    $region22: #{emotion_lstm_forward.1} parent=1 // pred_check
      _
    $region23: #{emotion_lstm_forward.1} parent=1 // pred_check_branch
      %44 = sbr.rel (0) target = $region25
    $region24: #{emotion_lstm_forward.1} parent=1 // pred_region
      _
    $region25: #{emotion_lstm_forward.1} parent=1 // pred_fallthru
      _
    // Predicated region
    $region26: #{emotion_lstm_forward.1} parent=1 // pred_check
      _
    $region27: #{emotion_lstm_forward.1} parent=1 // pred_check_branch
      %46 = sbr.rel (0) target = $region29
    $region28: #{emotion_lstm_forward.1} parent=1 // pred_region
      %47 = dma.done [#allocation4], 2048
    $region29: #{emotion_lstm_forward.1} parent=1 // pred_fallthru
      _
    // Predicated region
    $region30: #{emotion_lstm_forward.1} parent=1 // pred_check
      _
    $region31: #{emotion_lstm_forward.1} parent=1 // pred_check_branch
      %49 = sbr.rel (0) target = $region33
    $region32: #{emotion_lstm_forward.1} parent=1 // pred_region
      %50 = dma.done [#allocation6], 1024
    $region33: #{emotion_lstm_forward.1} parent=1 // pred_fallthru
      _
    %v51 = vld [vmem:[%s0] sm:$0xff]
    %v52 = vld [vmem:[%s0 + $0x8] sm:$0xff]
    %v53 = vld [vmem:[%s0 + $0x10] sm:$0xff]
    %v54 = vld [vmem:[%s0 + $0x18] sm:$0xff]
    %v55 = vld [vmem:[%s0 + $0x20] sm:$0xff]
    %v56 = vld [vmem:[%s0 + $0x28] sm:$0xff]
    %v57 = vld [vmem:[%s0 + $0x30] sm:$0xff]
    %v58 = vld [vmem:[%s0 + $0x38] sm:$0xff]
    %v59 = vld [vmem:[%s1] sm:$0xff]
    %v60 = vld [vmem:[%s1 + $0x8] sm:$0xff]
    %v61 = vld [vmem:[%s1 + $0x10] sm:$0xff]
    %v62 = vld [vmem:[%s1 + $0x18] sm:$0xff]
    %v63 = vld [vmem:[%s1 + $0x20] sm:$0xff]
    %v64 = vld [vmem:[%s1 + $0x28] sm:$0xff]
    %v65 = vld [vmem:[%s1 + $0x30] sm:$0xff]
    %v66 = vld [vmem:[%s1 + $0x38] sm:$0xff]
    %v67 = vld [vmem:[%s3] sm:$0x3]
    %v69 = vlaneseq
    %v70 = vshrl.u32 %v69, 7
    %v71 = vsub.s32 0, %v70
    %v72 = vrot.slane %v67, %v71
    %v73 = vlaneseq
    %v74 = vshrl.u32 %v73, 7
    %v75 = vsub.s32 1, %v74
    %v76 = vrot.slane %v67, %v75
    %vm79 = vcmask 261120
    %v81 = vsel %vm79, %v51, 0
    %v84 = vsel %vm79, %v52, 0
    %v87 = vsel %vm79, %v53, 0
    %v90 = vsel %vm79, %v54, 0
    %v93 = vsel %vm79, %v55, 0
    %v96 = vsel %vm79, %v56, 0
    %v99 = vsel %vm79, %v57, 0
    %v102 = vsel %vm79, %v58, 0
    %104 = vmatprep.subr.mxu0 0.0
    %105 = vmatpush1.msra.mxu0 0.0
    %106 = vmatprep.subr.mxu0 0.0
    %107 = vmatpush1.msra.mxu0 0.0
    %108 = vmatprep.subr.mxu0 0.0
    %109 = vmatpush1.msra.mxu0 0.0
    %110 = vmatprep.subr.mxu0 0.0
    %111 = vmatpush1.msra.mxu0 0.0
    %112 = vmatprep.subr.mxu0 0.0
    %113 = vmatpush1.msra.mxu0 0.0
    %114 = vmatprep.subr.mxu0 0.0
    %115 = vmatpush1.msra.mxu0 0.0
    %116 = vmatprep.subr.mxu0 0.0
    %117 = vmatpush1.msra.mxu0 0.0
    %118 = vmatprep.subr.mxu0 0.0
    %119 = vmatpush1.msra.mxu0 0.0
    %120 = vmatprep.subr.mxu0 0.0
    %121 = vmatpush1.msra.mxu0 0.0
    %122 = vmatprep.subr.mxu0 0.0
    %123 = vmatpush1.msra.mxu0 0.0
    %124 = vmatprep.subr.mxu0 0.0
    %125 = vmatpush1.msra.mxu0 0.0
    %126 = vmatprep.subr.mxu0 0.0
    %127 = vmatpush1.msra.mxu0 0.0
    %128 = vmatprep.subr.mxu0 %v66
    %129 = vmatpush1.msra.mxu0 %v65
    %130 = vmatprep.subr.mxu0 %v64
    %131 = vmatpush1.msra.mxu0 %v63
    %132 = vmatprep.subr.mxu0 %v62
    %133 = vmatpush1.msra.mxu0 %v61
    %134 = vmatprep.subr.mxu0 %v60
    %135 = vmatpush1.msra.mxu0 %v59
    %136 = vmatprep.subr.mxu0 0.0
    %137 = vmatpush2.msra.mxu0 0.0
    %138 = vmatprep.subr.mxu0 0.0
    %139 = vmatpush2.msra.mxu0 0.0
    %140 = vmatprep.subr.mxu0 0.0
    %141 = vmatpush2.msra.mxu0 0.0
    %142 = vmatprep.subr.mxu0 0.0
    %143 = vmatpush2.msra.mxu0 0.0
    %144 = vmatprep.subr.mxu0 0.0
    %145 = vmatpush2.msra.mxu0 0.0
    %146 = vmatprep.subr.mxu0 0.0
    %147 = vmatpush2.msra.mxu0 0.0
    %148 = vmatprep.subr.mxu0 0.0
    %149 = vmatpush2.msra.mxu0 0.0
    %150 = vmatprep.subr.mxu0 0.0
    %151 = vmatpush2.msra.mxu0 0.0
    %152 = vmatprep.subr.mxu0 0.0
    %153 = vmatpush2.msra.mxu0 0.0
    %154 = vmatprep.subr.mxu0 0.0
    %155 = vmatpush2.msra.mxu0 0.0
    %156 = vmatprep.subr.mxu0 0.0
    %157 = vmatpush2.msra.mxu0 0.0
    %158 = vmatprep.subr.mxu0 0.0
    %159 = vmatpush2.msra.mxu0 0.0
    %160 = vmatprep.subr.mxu0 0.0
    %161 = vmatpush2.msra.mxu0 0.0
    %162 = vmatprep.subr.mxu0 0.0
    %163 = vmatpush2.msra.mxu0 0.0
    %164 = vmatprep.subr.mxu0 0.0
    %165 = vmatpush2.msra.mxu0 0.0
    %166 = vmatprep.subr.mxu0 0.0
    %167 = vmatpush2.msra.mxu0 0.0
    %168 = vmatprep.mubr.f32.mxu0 0.0
    %169 = vmatmul.mubr.f32.gmra.mxu0 %v81
    %v170 = vpop.f32.mrf.mxu0
    %v171 = vadd.f32 %v72, %v170
    %v172 = vpop.f32.mrf.mxu0
    %v173 = vadd.f32 %v76, %v172
    %174 = vmatprep.mubr.f32.mxu0 0.0
    %175 = vmatmul.mubr.f32.gmra.mxu0 %v84
    %v176 = vpop.f32.mrf.mxu0
    %v177 = vadd.f32 %v72, %v176
    %v178 = vpop.f32.mrf.mxu0
    %v179 = vadd.f32 %v76, %v178
    %180 = vmatprep.mubr.f32.mxu0 0.0
    %181 = vmatmul.mubr.f32.gmra.mxu0 %v87
    %v182 = vpop.f32.mrf.mxu0
    %v183 = vadd.f32 %v72, %v182
    %v184 = vpop.f32.mrf.mxu0
    %v185 = vadd.f32 %v76, %v184
    %186 = vmatprep.mubr.f32.mxu0 0.0
    %187 = vmatmul.mubr.f32.gmra.mxu0 %v90
    %v188 = vpop.f32.mrf.mxu0
    %v189 = vadd.f32 %v72, %v188
    %v190 = vpop.f32.mrf.mxu0
    %v191 = vadd.f32 %v76, %v190
    %192 = vmatprep.mubr.f32.mxu0 0.0
    %193 = vmatmul.mubr.f32.gmra.mxu0 %v93
    %v194 = vpop.f32.mrf.mxu0
    %v195 = vadd.f32 %v72, %v194
    %v196 = vpop.f32.mrf.mxu0
    %v197 = vadd.f32 %v76, %v196
    %198 = vmatprep.mubr.f32.mxu0 0.0
    %199 = vmatmul.mubr.f32.gmra.mxu0 %v96
    %v200 = vpop.f32.mrf.mxu0
    %v201 = vadd.f32 %v72, %v200
    %v202 = vpop.f32.mrf.mxu0
    %v203 = vadd.f32 %v76, %v202
    %204 = vmatprep.mubr.f32.mxu0 0.0
    %205 = vmatmul.mubr.f32.gmra.mxu0 %v99
    %v206 = vpop.f32.mrf.mxu0
    %v207 = vadd.f32 %v72, %v206
    %v208 = vpop.f32.mrf.mxu0
    %v209 = vadd.f32 %v76, %v208
    %210 = vmatprep.mubr.f32.mxu0 0.0
    %211 = vmatmul.mubr.f32.gmra.mxu0 %v102
    %v212 = vpop.f32.mrf.mxu0
    %v213 = vadd.f32 %v72, %v212
    %v214 = vpop.f32.mrf.mxu0
    %v215 = vadd.f32 %v76, %v214
    %216 = vdwg.mxu0
    %217 = vst [vmem:[#allocation2] sm:$0xff] %v171
    %218 = vst [vmem:[#allocation2 + $0x8] sm:$0xff] %v173
    %219 = vst [vmem:[#allocation2 + $0x10] sm:$0xff] %v177
    %220 = vst [vmem:[#allocation2 + $0x18] sm:$0xff] %v179
    %221 = vst [vmem:[#allocation2 + $0x20] sm:$0xff] %v183
    %222 = vst [vmem:[#allocation2 + $0x28] sm:$0xff] %v185
    %223 = vst [vmem:[#allocation2 + $0x30] sm:$0xff] %v189
    %224 = vst [vmem:[#allocation2 + $0x38] sm:$0xff] %v191
    %225 = vst [vmem:[#allocation2 + $0x40] sm:$0xff] %v195
    %226 = vst [vmem:[#allocation2 + $0x48] sm:$0xff] %v197
    %227 = vst [vmem:[#allocation2 + $0x50] sm:$0xff] %v201
    %228 = vst [vmem:[#allocation2 + $0x58] sm:$0xff] %v203
    %229 = vst [vmem:[#allocation2 + $0x60] sm:$0xff] %v207
    %230 = vst [vmem:[#allocation2 + $0x68] sm:$0xff] %v209
    %231 = vst [vmem:[#allocation2 + $0x70] sm:$0xff] %v213
    %232 = vst [vmem:[#allocation2 + $0x78] sm:$0xff] %v215
    %v233 = vld [vmem:[#allocation2] sm:$0xff]
    %v234 = vld [vmem:[#allocation2 + $0x8] sm:$0xff]
    %v235 = vld [vmem:[#allocation3] sm:$0xff]
    %v236 = vld [vmem:[#allocation3 + $0x8] sm:$0xff]
    %v237 = vld [vmem:[#allocation3 + $0x10] sm:$0xff]
    %v238 = vld [vmem:[#allocation3 + $0x18] sm:$0xff]
    %v239 = vld [vmem:[#allocation3 + $0x20] sm:$0xff]
    %v240 = vld [vmem:[#allocation3 + $0x28] sm:$0xff]
    %v241 = vld [vmem:[#allocation3 + $0x30] sm:$0xff]
    %v242 = vld [vmem:[#allocation3 + $0x38] sm:$0xff]
    %v243 = vld [vmem:[#allocation3 + $0x40] sm:$0xff]
    %v244 = vld [vmem:[#allocation3 + $0x48] sm:$0xff]
    %v245 = vld [vmem:[#allocation3 + $0x50] sm:$0xff]
    %v246 = vld [vmem:[#allocation3 + $0x58] sm:$0xff]
    %v247 = vld [vmem:[#allocation3 + $0x60] sm:$0xff]
    %v248 = vld [vmem:[#allocation3 + $0x68] sm:$0xff]
    %v249 = vld [vmem:[#allocation3 + $0x70] sm:$0xff]
    %v250 = vld [vmem:[#allocation3 + $0x78] sm:$0xff]
    %vm251 = vcmask 523264
    %v253 = vsel %vm251, 0.0, 0
    %255 = vmatprep.subr.mxu0 0.0
    %256 = vmatpush1.msra.mxu0 0.0
    %257 = vmatprep.subr.mxu0 0.0
    %258 = vmatpush1.msra.mxu0 0.0
    %259 = vmatprep.subr.mxu0 0.0
    %260 = vmatpush1.msra.mxu0 0.0
    %261 = vmatprep.subr.mxu0 0.0
    %262 = vmatpush1.msra.mxu0 0.0
    %263 = vmatprep.subr.mxu0 0.0
    %264 = vmatpush1.msra.mxu0 0.0
    %265 = vmatprep.subr.mxu0 0.0
    %266 = vmatpush1.msra.mxu0 0.0
    %267 = vmatprep.subr.mxu0 0.0
    %268 = vmatpush1.msra.mxu0 0.0
    %269 = vmatprep.subr.mxu0 0.0
    %270 = vmatpush1.msra.mxu0 0.0
    %271 = vmatprep.subr.mxu0 %v250
    %272 = vmatpush1.msra.mxu0 %v249
    %273 = vmatprep.subr.mxu0 %v248
    %274 = vmatpush1.msra.mxu0 %v247
    %275 = vmatprep.subr.mxu0 %v246
    %276 = vmatpush1.msra.mxu0 %v245
    %277 = vmatprep.subr.mxu0 %v244
    %278 = vmatpush1.msra.mxu0 %v243
    %279 = vmatprep.subr.mxu0 %v242
    %280 = vmatpush1.msra.mxu0 %v241
    %281 = vmatprep.subr.mxu0 %v240
    %282 = vmatpush1.msra.mxu0 %v239
    %283 = vmatprep.subr.mxu0 %v238
    %284 = vmatpush1.msra.mxu0 %v237
    %285 = vmatprep.subr.mxu0 %v236
    %286 = vmatpush1.msra.mxu0 %v235
    %287 = vmatprep.subr.mxu0 0.0
    %288 = vmatpush2.msra.mxu0 0.0
    %289 = vmatprep.subr.mxu0 0.0
    %290 = vmatpush2.msra.mxu0 0.0
    %291 = vmatprep.subr.mxu0 0.0
    %292 = vmatpush2.msra.mxu0 0.0
    %293 = vmatprep.subr.mxu0 0.0
    %294 = vmatpush2.msra.mxu0 0.0
    %295 = vmatprep.subr.mxu0 0.0
    %296 = vmatpush2.msra.mxu0 0.0
    %297 = vmatprep.subr.mxu0 0.0
    %298 = vmatpush2.msra.mxu0 0.0
    %299 = vmatprep.subr.mxu0 0.0
    %300 = vmatpush2.msra.mxu0 0.0
    %301 = vmatprep.subr.mxu0 0.0
    %302 = vmatpush2.msra.mxu0 0.0
    %303 = vmatprep.subr.mxu0 0.0
    %304 = vmatpush2.msra.mxu0 0.0
    %305 = vmatprep.subr.mxu0 0.0
    %306 = vmatpush2.msra.mxu0 0.0
    %307 = vmatprep.subr.mxu0 0.0
    %308 = vmatpush2.msra.mxu0 0.0
    %309 = vmatprep.subr.mxu0 0.0
    %310 = vmatpush2.msra.mxu0 0.0
    %311 = vmatprep.subr.mxu0 0.0
    %312 = vmatpush2.msra.mxu0 0.0
    %313 = vmatprep.subr.mxu0 0.0
    %314 = vmatpush2.msra.mxu0 0.0
    %315 = vmatprep.subr.mxu0 0.0
    %316 = vmatpush2.msra.mxu0 0.0
    %317 = vmatprep.subr.mxu0 0.0
    %318 = vmatpush2.msra.mxu0 0.0
    %319 = vmatprep.mubr.f32.mxu0 0.0
    %320 = vmatmul.mubr.f32.gmra.mxu0 %v253
    %v321 = vpop.f32.mrf.mxu0
    %v322 = vadd.f32 0.0, %v321
    %v323 = vpop.f32.mrf.mxu0
    %v324 = vadd.f32 0.0, %v323
    %325 = vdwg.mxu0
    %v326 = vadd.f32 %v233, %v322
    %v327 = vadd.f32 %v234, %v324
    %v328 = vxor.u32 %v326, 2147483648
    %v329 = vmul.f32 %v328, 1.442695
    %v330 = vpow.pop %v329
    %v331 = vadd.f32 %v330, 1.0
    %v332 = vrcp.pop %v331
    %v333 = vmul.f32 1.0, %v332
    %v334 = vxor.u32 %v327, 2147483648
    %v335 = vmul.f32 %v334, 1.442695
    %v336 = vpow.pop %v335
    %v337 = vadd.f32 %v336, 1.0
    %v338 = vrcp.pop %v337
    %v339 = vmul.f32 1.0, %v338
    %v340 = vtanh.pop %v327
    %v341 = vmul.f32 %v333, 0.0
    %343 = vrot.lane.b32.xlu0 %v340, 64
    %v344 = vpop.permute.xlu0 %343
    %v346 = vmul.f32 %v333, %v344
    %348 = vrot.lane.b32.xlu0 %v346, 64
    %v349 = vpop.permute.xlu0 %348
    %v351 = vadd.f32 %v341, %v349
    %v352 = vtanh.pop %v351
    %354 = vrot.lane.b32.xlu0 %v352, 64
    %v355 = vpop.permute.xlu0 %354
    %v357 = vmul.f32 %v339, %v355
    %v358 = vld [vmem:[#allocation2 + $0x10] sm:$0xff]
    %v359 = vld [vmem:[#allocation2 + $0x18] sm:$0xff]
    %v361 = vsel %vm251, %v357, 0
    %363 = vmatprep.subr.mxu0 0.0
    %364 = vmatpush1.msra.mxu0 0.0
    %365 = vmatprep.subr.mxu0 0.0
    %366 = vmatpush1.msra.mxu0 0.0
    %367 = vmatprep.subr.mxu0 0.0
    %368 = vmatpush1.msra.mxu0 0.0
    %369 = vmatprep.subr.mxu0 0.0
    %370 = vmatpush1.msra.mxu0 0.0
    %371 = vmatprep.subr.mxu0 0.0
    %372 = vmatpush1.msra.mxu0 0.0
    %373 = vmatprep.subr.mxu0 0.0
    %374 = vmatpush1.msra.mxu0 0.0
    %375 = vmatprep.subr.mxu0 0.0
    %376 = vmatpush1.msra.mxu0 0.0
    %377 = vmatprep.subr.mxu0 0.0
    %378 = vmatpush1.msra.mxu0 0.0
    %379 = vmatprep.subr.mxu0 %v250
    %380 = vmatpush1.msra.mxu0 %v249
    %381 = vmatprep.subr.mxu0 %v248
    %382 = vmatpush1.msra.mxu0 %v247
    %383 = vmatprep.subr.mxu0 %v246
    %384 = vmatpush1.msra.mxu0 %v245
    %385 = vmatprep.subr.mxu0 %v244
    %386 = vmatpush1.msra.mxu0 %v243
    %387 = vmatprep.subr.mxu0 %v242
    %388 = vmatpush1.msra.mxu0 %v241
    %389 = vmatprep.subr.mxu0 %v240
    %390 = vmatpush1.msra.mxu0 %v239
    %391 = vmatprep.subr.mxu0 %v238
    %392 = vmatpush1.msra.mxu0 %v237
    %393 = vmatprep.subr.mxu0 %v236
    %394 = vmatpush1.msra.mxu0 %v235
    %395 = vmatprep.subr.mxu0 0.0
    %396 = vmatpush2.msra.mxu0 0.0
    %397 = vmatprep.subr.mxu0 0.0
    %398 = vmatpush2.msra.mxu0 0.0
    %399 = vmatprep.subr.mxu0 0.0
    %400 = vmatpush2.msra.mxu0 0.0
    %401 = vmatprep.subr.mxu0 0.0
    %402 = vmatpush2.msra.mxu0 0.0
    %403 = vmatprep.subr.mxu0 0.0
    %404 = vmatpush2.msra.mxu0 0.0
    %405 = vmatprep.subr.mxu0 0.0
    %406 = vmatpush2.msra.mxu0 0.0
    %407 = vmatprep.subr.mxu0 0.0
    %408 = vmatpush2.msra.mxu0 0.0
    %409 = vmatprep.subr.mxu0 0.0
    %410 = vmatpush2.msra.mxu0 0.0
    %411 = vmatprep.subr.mxu0 0.0
    %412 = vmatpush2.msra.mxu0 0.0
    %413 = vmatprep.subr.mxu0 0.0
    %414 = vmatpush2.msra.mxu0 0.0
    %415 = vmatprep.subr.mxu0 0.0
    %416 = vmatpush2.msra.mxu0 0.0
    %417 = vmatprep.subr.mxu0 0.0
    %418 = vmatpush2.msra.mxu0 0.0
    %419 = vmatprep.subr.mxu0 0.0
    %420 = vmatpush2.msra.mxu0 0.0
    %421 = vmatprep.subr.mxu0 0.0
    %422 = vmatpush2.msra.mxu0 0.0
    %423 = vmatprep.subr.mxu0 0.0
    %424 = vmatpush2.msra.mxu0 0.0
    %425 = vmatprep.subr.mxu0 0.0
    %426 = vmatpush2.msra.mxu0 0.0
    %427 = vmatprep.mubr.f32.mxu0 0.0
    %428 = vmatmul.mubr.f32.gmra.mxu0 %v361
    %v429 = vpop.f32.mrf.mxu0
    %v430 = vadd.f32 0.0, %v429
    %v431 = vpop.f32.mrf.mxu0
    %v432 = vadd.f32 0.0, %v431
    %433 = vdwg.mxu0
    %v434 = vadd.f32 %v358, %v430
    %v435 = vadd.f32 %v359, %v432
    %v436 = vxor.u32 %v434, 2147483648
    %v437 = vmul.f32 %v436, 1.442695
    %v438 = vpow.pop %v437
    %v439 = vadd.f32 %v438, 1.0
    %v440 = vrcp.pop %v439
    %v441 = vmul.f32 1.0, %v440
    %v442 = vxor.u32 %v435, 2147483648
    %v443 = vmul.f32 %v442, 1.442695
    %v444 = vpow.pop %v443
    %v445 = vadd.f32 %v444, 1.0
    %v446 = vrcp.pop %v445
    %v447 = vmul.f32 1.0, %v446
    %v448 = vtanh.pop %v435
    %v449 = vmul.f32 %v441, %v351
    %451 = vrot.lane.b32.xlu0 %v448, 64
    %v452 = vpop.permute.xlu0 %451
    %v454 = vmul.f32 %v441, %v452
    %456 = vrot.lane.b32.xlu0 %v454, 64
    %v457 = vpop.permute.xlu0 %456
    %v459 = vadd.f32 %v449, %v457
    %v460 = vtanh.pop %v459
    %462 = vrot.lane.b32.xlu0 %v460, 64
    %v463 = vpop.permute.xlu0 %462
    %v465 = vmul.f32 %v447, %v463
    %v466 = vld [vmem:[#allocation2 + $0x20] sm:$0xff]
    %v467 = vld [vmem:[#allocation2 + $0x28] sm:$0xff]
    %v469 = vsel %vm251, %v465, 0
    %471 = vmatprep.subr.mxu0 0.0
    %472 = vmatpush1.msra.mxu0 0.0
    %473 = vmatprep.subr.mxu0 0.0
    %474 = vmatpush1.msra.mxu0 0.0
    %475 = vmatprep.subr.mxu0 0.0
    %476 = vmatpush1.msra.mxu0 0.0
    %477 = vmatprep.subr.mxu0 0.0
    %478 = vmatpush1.msra.mxu0 0.0
    %479 = vmatprep.subr.mxu0 0.0
    %480 = vmatpush1.msra.mxu0 0.0
    %481 = vmatprep.subr.mxu0 0.0
    %482 = vmatpush1.msra.mxu0 0.0
    %483 = vmatprep.subr.mxu0 0.0
    %484 = vmatpush1.msra.mxu0 0.0
    %485 = vmatprep.subr.mxu0 0.0
    %486 = vmatpush1.msra.mxu0 0.0
    %487 = vmatprep.subr.mxu0 %v250
    %488 = vmatpush1.msra.mxu0 %v249
    %489 = vmatprep.subr.mxu0 %v248
    %490 = vmatpush1.msra.mxu0 %v247
    %491 = vmatprep.subr.mxu0 %v246
    %492 = vmatpush1.msra.mxu0 %v245
    %493 = vmatprep.subr.mxu0 %v244
    %494 = vmatpush1.msra.mxu0 %v243
    %495 = vmatprep.subr.mxu0 %v242
    %496 = vmatpush1.msra.mxu0 %v241
    %497 = vmatprep.subr.mxu0 %v240
    %498 = vmatpush1.msra.mxu0 %v239
    %499 = vmatprep.subr.mxu0 %v238
    %500 = vmatpush1.msra.mxu0 %v237
    %501 = vmatprep.subr.mxu0 %v236
    %502 = vmatpush1.msra.mxu0 %v235
    %503 = vmatprep.subr.mxu0 0.0
    %504 = vmatpush2.msra.mxu0 0.0
    %505 = vmatprep.subr.mxu0 0.0
    %506 = vmatpush2.msra.mxu0 0.0
    %507 = vmatprep.subr.mxu0 0.0
    %508 = vmatpush2.msra.mxu0 0.0
    %509 = vmatprep.subr.mxu0 0.0
    %510 = vmatpush2.msra.mxu0 0.0
    %511 = vmatprep.subr.mxu0 0.0
    %512 = vmatpush2.msra.mxu0 0.0
    %513 = vmatprep.subr.mxu0 0.0
    %514 = vmatpush2.msra.mxu0 0.0
    %515 = vmatprep.subr.mxu0 0.0
    %516 = vmatpush2.msra.mxu0 0.0
    %517 = vmatprep.subr.mxu0 0.0
    %518 = vmatpush2.msra.mxu0 0.0
    %519 = vmatprep.subr.mxu0 0.0
    %520 = vmatpush2.msra.mxu0 0.0
    %521 = vmatprep.subr.mxu0 0.0
    %522 = vmatpush2.msra.mxu0 0.0
    %523 = vmatprep.subr.mxu0 0.0
    %524 = vmatpush2.msra.mxu0 0.0
    %525 = vmatprep.subr.mxu0 0.0
    %526 = vmatpush2.msra.mxu0 0.0
    %527 = vmatprep.subr.mxu0 0.0
    %528 = vmatpush2.msra.mxu0 0.0
    %529 = vmatprep.subr.mxu0 0.0
    %530 = vmatpush2.msra.mxu0 0.0
    %531 = vmatprep.subr.mxu0 0.0
    %532 = vmatpush2.msra.mxu0 0.0
    %533 = vmatprep.subr.mxu0 0.0
    %534 = vmatpush2.msra.mxu0 0.0
    %535 = vmatprep.mubr.f32.mxu0 0.0
    %536 = vmatmul.mubr.f32.gmra.mxu0 %v469
    %v537 = vpop.f32.mrf.mxu0
    %v538 = vadd.f32 0.0, %v537
    %v539 = vpop.f32.mrf.mxu0
    %v540 = vadd.f32 0.0, %v539
    %541 = vdwg.mxu0
    %v542 = vadd.f32 %v466, %v538
    %v543 = vadd.f32 %v467, %v540
    %v544 = vxor.u32 %v542, 2147483648
    %v545 = vmul.f32 %v544, 1.442695
    %v546 = vpow.pop %v545
    %v547 = vadd.f32 %v546, 1.0
    %v548 = vrcp.pop %v547
    %v549 = vmul.f32 1.0, %v548
    %v550 = vxor.u32 %v543, 2147483648
    %v551 = vmul.f32 %v550, 1.442695
    %v552 = vpow.pop %v551
    %v553 = vadd.f32 %v552, 1.0
    %v554 = vrcp.pop %v553
    %v555 = vmul.f32 1.0, %v554
    %v556 = vtanh.pop %v543
    %v557 = vmul.f32 %v549, %v459
    %559 = vrot.lane.b32.xlu0 %v556, 64
    %v560 = vpop.permute.xlu0 %559
    %v562 = vmul.f32 %v549, %v560
    %564 = vrot.lane.b32.xlu0 %v562, 64
    %v565 = vpop.permute.xlu0 %564
    %v567 = vadd.f32 %v557, %v565
    %v568 = vtanh.pop %v567
    %570 = vrot.lane.b32.xlu0 %v568, 64
    %v571 = vpop.permute.xlu0 %570
    %v573 = vmul.f32 %v555, %v571
    %v574 = vld [vmem:[#allocation2 + $0x30] sm:$0xff]
    %v575 = vld [vmem:[#allocation2 + $0x38] sm:$0xff]
    %v577 = vsel %vm251, %v573, 0
    %579 = vmatprep.subr.mxu0 0.0
    %580 = vmatpush1.msra.mxu0 0.0
    %581 = vmatprep.subr.mxu0 0.0
    %582 = vmatpush1.msra.mxu0 0.0
    %583 = vmatprep.subr.mxu0 0.0
    %584 = vmatpush1.msra.mxu0 0.0
    %585 = vmatprep.subr.mxu0 0.0
    %586 = vmatpush1.msra.mxu0 0.0
    %587 = vmatprep.subr.mxu0 0.0
    %588 = vmatpush1.msra.mxu0 0.0
    %589 = vmatprep.subr.mxu0 0.0
    %590 = vmatpush1.msra.mxu0 0.0
    %591 = vmatprep.subr.mxu0 0.0
    %592 = vmatpush1.msra.mxu0 0.0
    %593 = vmatprep.subr.mxu0 0.0
    %594 = vmatpush1.msra.mxu0 0.0
    %595 = vmatprep.subr.mxu0 %v250
    %596 = vmatpush1.msra.mxu0 %v249
    %597 = vmatprep.subr.mxu0 %v248
    %598 = vmatpush1.msra.mxu0 %v247
    %599 = vmatprep.subr.mxu0 %v246
    %600 = vmatpush1.msra.mxu0 %v245
    %601 = vmatprep.subr.mxu0 %v244
    %602 = vmatpush1.msra.mxu0 %v243
    %603 = vmatprep.subr.mxu0 %v242
    %604 = vmatpush1.msra.mxu0 %v241
    %605 = vmatprep.subr.mxu0 %v240
    %606 = vmatpush1.msra.mxu0 %v239
    %607 = vmatprep.subr.mxu0 %v238
    %608 = vmatpush1.msra.mxu0 %v237
    %609 = vmatprep.subr.mxu0 %v236
    %610 = vmatpush1.msra.mxu0 %v235
    %611 = vmatprep.subr.mxu0 0.0
    %612 = vmatpush2.msra.mxu0 0.0
    %613 = vmatprep.subr.mxu0 0.0
    %614 = vmatpush2.msra.mxu0 0.0
    %615 = vmatprep.subr.mxu0 0.0
    %616 = vmatpush2.msra.mxu0 0.0
    %617 = vmatprep.subr.mxu0 0.0
    %618 = vmatpush2.msra.mxu0 0.0
    %619 = vmatprep.subr.mxu0 0.0
    %620 = vmatpush2.msra.mxu0 0.0
    %621 = vmatprep.subr.mxu0 0.0
    %622 = vmatpush2.msra.mxu0 0.0
    %623 = vmatprep.subr.mxu0 0.0
    %624 = vmatpush2.msra.mxu0 0.0
    %625 = vmatprep.subr.mxu0 0.0
    %626 = vmatpush2.msra.mxu0 0.0
    %627 = vmatprep.subr.mxu0 0.0
    %628 = vmatpush2.msra.mxu0 0.0
    %629 = vmatprep.subr.mxu0 0.0
    %630 = vmatpush2.msra.mxu0 0.0
    %631 = vmatprep.subr.mxu0 0.0
    %632 = vmatpush2.msra.mxu0 0.0
    %633 = vmatprep.subr.mxu0 0.0
    %634 = vmatpush2.msra.mxu0 0.0
    %635 = vmatprep.subr.mxu0 0.0
    %636 = vmatpush2.msra.mxu0 0.0
    %637 = vmatprep.subr.mxu0 0.0
    %638 = vmatpush2.msra.mxu0 0.0
    %639 = vmatprep.subr.mxu0 0.0
    %640 = vmatpush2.msra.mxu0 0.0
    %641 = vmatprep.subr.mxu0 0.0
    %642 = vmatpush2.msra.mxu0 0.0
    %643 = vmatprep.mubr.f32.mxu0 0.0
    %644 = vmatmul.mubr.f32.gmra.mxu0 %v577
    %v645 = vpop.f32.mrf.mxu0
    %v646 = vadd.f32 0.0, %v645
    %v647 = vpop.f32.mrf.mxu0
    %v648 = vadd.f32 0.0, %v647
    %649 = vdwg.mxu0
    %v650 = vadd.f32 %v574, %v646
    %v651 = vadd.f32 %v575, %v648
    %v652 = vxor.u32 %v650, 2147483648
    %v653 = vmul.f32 %v652, 1.442695
    %v654 = vpow.pop %v653
    %v655 = vadd.f32 %v654, 1.0
    %v656 = vrcp.pop %v655
    %v657 = vmul.f32 1.0, %v656
    %v658 = vxor.u32 %v651, 2147483648
    %v659 = vmul.f32 %v658, 1.442695
    %v660 = vpow.pop %v659
    %v661 = vadd.f32 %v660, 1.0
    %v662 = vrcp.pop %v661
    %v663 = vmul.f32 1.0, %v662
    %v664 = vtanh.pop %v651
    %v665 = vmul.f32 %v657, %v567
    %667 = vrot.lane.b32.xlu0 %v664, 64
    %v668 = vpop.permute.xlu0 %667
    %v670 = vmul.f32 %v657, %v668
    %672 = vrot.lane.b32.xlu0 %v670, 64
    %v673 = vpop.permute.xlu0 %672
    %v675 = vadd.f32 %v665, %v673
    %v676 = vtanh.pop %v675
    %678 = vrot.lane.b32.xlu0 %v676, 64
    %v679 = vpop.permute.xlu0 %678
    %v681 = vmul.f32 %v663, %v679
    %v682 = vld [vmem:[#allocation2 + $0x40] sm:$0xff]
    %v683 = vld [vmem:[#allocation2 + $0x48] sm:$0xff]
    %v685 = vsel %vm251, %v681, 0
    %687 = vmatprep.subr.mxu0 0.0
    %688 = vmatpush1.msra.mxu0 0.0
    %689 = vmatprep.subr.mxu0 0.0
    %690 = vmatpush1.msra.mxu0 0.0
    %691 = vmatprep.subr.mxu0 0.0
    %692 = vmatpush1.msra.mxu0 0.0
    %693 = vmatprep.subr.mxu0 0.0
    %694 = vmatpush1.msra.mxu0 0.0
    %695 = vmatprep.subr.mxu0 0.0
    %696 = vmatpush1.msra.mxu0 0.0
    %697 = vmatprep.subr.mxu0 0.0
    %698 = vmatpush1.msra.mxu0 0.0
    %699 = vmatprep.subr.mxu0 0.0
    %700 = vmatpush1.msra.mxu0 0.0
    %701 = vmatprep.subr.mxu0 0.0
    %702 = vmatpush1.msra.mxu0 0.0
    %703 = vmatprep.subr.mxu0 %v250
    %704 = vmatpush1.msra.mxu0 %v249
    %705 = vmatprep.subr.mxu0 %v248
    %706 = vmatpush1.msra.mxu0 %v247
    %707 = vmatprep.subr.mxu0 %v246
    %708 = vmatpush1.msra.mxu0 %v245
    %709 = vmatprep.subr.mxu0 %v244
    %710 = vmatpush1.msra.mxu0 %v243
    %711 = vmatprep.subr.mxu0 %v242
    %712 = vmatpush1.msra.mxu0 %v241
    %713 = vmatprep.subr.mxu0 %v240
    %714 = vmatpush1.msra.mxu0 %v239
    %715 = vmatprep.subr.mxu0 %v238
    %716 = vmatpush1.msra.mxu0 %v237
    %717 = vmatprep.subr.mxu0 %v236
    %718 = vmatpush1.msra.mxu0 %v235
    %719 = vmatprep.subr.mxu0 0.0
    %720 = vmatpush2.msra.mxu0 0.0
    %721 = vmatprep.subr.mxu0 0.0
    %722 = vmatpush2.msra.mxu0 0.0
    %723 = vmatprep.subr.mxu0 0.0
    %724 = vmatpush2.msra.mxu0 0.0
    %725 = vmatprep.subr.mxu0 0.0
    %726 = vmatpush2.msra.mxu0 0.0
    %727 = vmatprep.subr.mxu0 0.0
    %728 = vmatpush2.msra.mxu0 0.0
    %729 = vmatprep.subr.mxu0 0.0
    %730 = vmatpush2.msra.mxu0 0.0
    %731 = vmatprep.subr.mxu0 0.0
    %732 = vmatpush2.msra.mxu0 0.0
    %733 = vmatprep.subr.mxu0 0.0
    %734 = vmatpush2.msra.mxu0 0.0
    %735 = vmatprep.subr.mxu0 0.0
    %736 = vmatpush2.msra.mxu0 0.0
    %737 = vmatprep.subr.mxu0 0.0
    %738 = vmatpush2.msra.mxu0 0.0
    %739 = vmatprep.subr.mxu0 0.0
    %740 = vmatpush2.msra.mxu0 0.0
    %741 = vmatprep.subr.mxu0 0.0
    %742 = vmatpush2.msra.mxu0 0.0
    %743 = vmatprep.subr.mxu0 0.0
    %744 = vmatpush2.msra.mxu0 0.0
    %745 = vmatprep.subr.mxu0 0.0
    %746 = vmatpush2.msra.mxu0 0.0
    %747 = vmatprep.subr.mxu0 0.0
    %748 = vmatpush2.msra.mxu0 0.0
    %749 = vmatprep.subr.mxu0 0.0
    %750 = vmatpush2.msra.mxu0 0.0
    %751 = vmatprep.mubr.f32.mxu0 0.0
    %752 = vmatmul.mubr.f32.gmra.mxu0 %v685
    %v753 = vpop.f32.mrf.mxu0
    %v754 = vadd.f32 0.0, %v753
    %v755 = vpop.f32.mrf.mxu0
    %v756 = vadd.f32 0.0, %v755
    %757 = vdwg.mxu0
    %v758 = vadd.f32 %v682, %v754
    %v759 = vadd.f32 %v683, %v756
    %v760 = vxor.u32 %v758, 2147483648
    %v761 = vmul.f32 %v760, 1.442695
    %v762 = vpow.pop %v761
    %v763 = vadd.f32 %v762, 1.0
    %v764 = vrcp.pop %v763
    %v765 = vmul.f32 1.0, %v764
    %v766 = vxor.u32 %v759, 2147483648
    %v767 = vmul.f32 %v766, 1.442695
    %v768 = vpow.pop %v767
    %v769 = vadd.f32 %v768, 1.0
    %v770 = vrcp.pop %v769
    %v771 = vmul.f32 1.0, %v770
    %v772 = vtanh.pop %v759
    %v773 = vmul.f32 %v765, %v675
    %775 = vrot.lane.b32.xlu0 %v772, 64
    %v776 = vpop.permute.xlu0 %775
    %v778 = vmul.f32 %v765, %v776
    %780 = vrot.lane.b32.xlu0 %v778, 64
    %v781 = vpop.permute.xlu0 %780
    %v783 = vadd.f32 %v773, %v781
    %v784 = vtanh.pop %v783
    %786 = vrot.lane.b32.xlu0 %v784, 64
    %v787 = vpop.permute.xlu0 %786
    %v789 = vmul.f32 %v771, %v787
    %v790 = vld [vmem:[#allocation2 + $0x50] sm:$0xff]
    %v791 = vld [vmem:[#allocation2 + $0x58] sm:$0xff]
    %v793 = vsel %vm251, %v789, 0
    %795 = vmatprep.subr.mxu0 0.0
    %796 = vmatpush1.msra.mxu0 0.0
    %797 = vmatprep.subr.mxu0 0.0
    %798 = vmatpush1.msra.mxu0 0.0
    %799 = vmatprep.subr.mxu0 0.0
    %800 = vmatpush1.msra.mxu0 0.0
    %801 = vmatprep.subr.mxu0 0.0
    %802 = vmatpush1.msra.mxu0 0.0
    %803 = vmatprep.subr.mxu0 0.0
    %804 = vmatpush1.msra.mxu0 0.0
    %805 = vmatprep.subr.mxu0 0.0
    %806 = vmatpush1.msra.mxu0 0.0
    %807 = vmatprep.subr.mxu0 0.0
    %808 = vmatpush1.msra.mxu0 0.0
    %809 = vmatprep.subr.mxu0 0.0
    %810 = vmatpush1.msra.mxu0 0.0
    %811 = vmatprep.subr.mxu0 %v250
    %812 = vmatpush1.msra.mxu0 %v249
    %813 = vmatprep.subr.mxu0 %v248
    %814 = vmatpush1.msra.mxu0 %v247
    %815 = vmatprep.subr.mxu0 %v246
    %816 = vmatpush1.msra.mxu0 %v245
    %817 = vmatprep.subr.mxu0 %v244
    %818 = vmatpush1.msra.mxu0 %v243
    %819 = vmatprep.subr.mxu0 %v242
    %820 = vmatpush1.msra.mxu0 %v241
    %821 = vmatprep.subr.mxu0 %v240
    %822 = vmatpush1.msra.mxu0 %v239
    %823 = vmatprep.subr.mxu0 %v238
    %824 = vmatpush1.msra.mxu0 %v237
    %825 = vmatprep.subr.mxu0 %v236
    %826 = vmatpush1.msra.mxu0 %v235
    %827 = vmatprep.subr.mxu0 0.0
    %828 = vmatpush2.msra.mxu0 0.0
    %829 = vmatprep.subr.mxu0 0.0
    %830 = vmatpush2.msra.mxu0 0.0
    %831 = vmatprep.subr.mxu0 0.0
    %832 = vmatpush2.msra.mxu0 0.0
    %833 = vmatprep.subr.mxu0 0.0
    %834 = vmatpush2.msra.mxu0 0.0
    %835 = vmatprep.subr.mxu0 0.0
    %836 = vmatpush2.msra.mxu0 0.0
    %837 = vmatprep.subr.mxu0 0.0
    %838 = vmatpush2.msra.mxu0 0.0
    %839 = vmatprep.subr.mxu0 0.0
    %840 = vmatpush2.msra.mxu0 0.0
    %841 = vmatprep.subr.mxu0 0.0
    %842 = vmatpush2.msra.mxu0 0.0
    %843 = vmatprep.subr.mxu0 0.0
    %844 = vmatpush2.msra.mxu0 0.0
    %845 = vmatprep.subr.mxu0 0.0
    %846 = vmatpush2.msra.mxu0 0.0
    %847 = vmatprep.subr.mxu0 0.0
    %848 = vmatpush2.msra.mxu0 0.0
    %849 = vmatprep.subr.mxu0 0.0
    %850 = vmatpush2.msra.mxu0 0.0
    %851 = vmatprep.subr.mxu0 0.0
    %852 = vmatpush2.msra.mxu0 0.0
    %853 = vmatprep.subr.mxu0 0.0
    %854 = vmatpush2.msra.mxu0 0.0
    %855 = vmatprep.subr.mxu0 0.0
    %856 = vmatpush2.msra.mxu0 0.0
    %857 = vmatprep.subr.mxu0 0.0
    %858 = vmatpush2.msra.mxu0 0.0
    %859 = vmatprep.mubr.f32.mxu0 0.0
    %860 = vmatmul.mubr.f32.gmra.mxu0 %v793
    %v861 = vpop.f32.mrf.mxu0
    %v862 = vadd.f32 0.0, %v861
    %v863 = vpop.f32.mrf.mxu0
    %v864 = vadd.f32 0.0, %v863
    %865 = vdwg.mxu0
    %v866 = vadd.f32 %v790, %v862
    %v867 = vadd.f32 %v791, %v864
    %v868 = vxor.u32 %v866, 2147483648
    %v869 = vmul.f32 %v868, 1.442695
    %v870 = vpow.pop %v869
    %v871 = vadd.f32 %v870, 1.0
    %v872 = vrcp.pop %v871
    %v873 = vmul.f32 1.0, %v872
    %v874 = vxor.u32 %v867, 2147483648
    %v875 = vmul.f32 %v874, 1.442695
    %v876 = vpow.pop %v875
    %v877 = vadd.f32 %v876, 1.0
    %v878 = vrcp.pop %v877
    %v879 = vmul.f32 1.0, %v878
    %v880 = vtanh.pop %v867
    %v881 = vmul.f32 %v873, %v783
    %883 = vrot.lane.b32.xlu0 %v880, 64
    %v884 = vpop.permute.xlu0 %883
    %v886 = vmul.f32 %v873, %v884
    %888 = vrot.lane.b32.xlu0 %v886, 64
    %v889 = vpop.permute.xlu0 %888
    %v891 = vadd.f32 %v881, %v889
    %v892 = vtanh.pop %v891
    %894 = vrot.lane.b32.xlu0 %v892, 64
    %v895 = vpop.permute.xlu0 %894
    %v897 = vmul.f32 %v879, %v895
    %v898 = vld [vmem:[#allocation2 + $0x60] sm:$0xff]
    %v899 = vld [vmem:[#allocation2 + $0x68] sm:$0xff]
    %v901 = vsel %vm251, %v897, 0
    %903 = vmatprep.subr.mxu0 0.0
    %904 = vmatpush1.msra.mxu0 0.0
    %905 = vmatprep.subr.mxu0 0.0
    %906 = vmatpush1.msra.mxu0 0.0
    %907 = vmatprep.subr.mxu0 0.0
    %908 = vmatpush1.msra.mxu0 0.0
    %909 = vmatprep.subr.mxu0 0.0
    %910 = vmatpush1.msra.mxu0 0.0
    %911 = vmatprep.subr.mxu0 0.0
    %912 = vmatpush1.msra.mxu0 0.0
    %913 = vmatprep.subr.mxu0 0.0
    %914 = vmatpush1.msra.mxu0 0.0
    %915 = vmatprep.subr.mxu0 0.0
    %916 = vmatpush1.msra.mxu0 0.0
    %917 = vmatprep.subr.mxu0 0.0
    %918 = vmatpush1.msra.mxu0 0.0
    %919 = vmatprep.subr.mxu0 %v250
    %920 = vmatpush1.msra.mxu0 %v249
    %921 = vmatprep.subr.mxu0 %v248
    %922 = vmatpush1.msra.mxu0 %v247
    %923 = vmatprep.subr.mxu0 %v246
    %924 = vmatpush1.msra.mxu0 %v245
    %925 = vmatprep.subr.mxu0 %v244
    %926 = vmatpush1.msra.mxu0 %v243
    %927 = vmatprep.subr.mxu0 %v242
    %928 = vmatpush1.msra.mxu0 %v241
    %929 = vmatprep.subr.mxu0 %v240
    %930 = vmatpush1.msra.mxu0 %v239
    %931 = vmatprep.subr.mxu0 %v238
    %932 = vmatpush1.msra.mxu0 %v237
    %933 = vmatprep.subr.mxu0 %v236
    %934 = vmatpush1.msra.mxu0 %v235
    %935 = vmatprep.subr.mxu0 0.0
    %936 = vmatpush2.msra.mxu0 0.0
    %937 = vmatprep.subr.mxu0 0.0
    %938 = vmatpush2.msra.mxu0 0.0
    %939 = vmatprep.subr.mxu0 0.0
    %940 = vmatpush2.msra.mxu0 0.0
    %941 = vmatprep.subr.mxu0 0.0
    %942 = vmatpush2.msra.mxu0 0.0
    %943 = vmatprep.subr.mxu0 0.0
    %944 = vmatpush2.msra.mxu0 0.0
    %945 = vmatprep.subr.mxu0 0.0
    %946 = vmatpush2.msra.mxu0 0.0
    %947 = vmatprep.subr.mxu0 0.0
    %948 = vmatpush2.msra.mxu0 0.0
    %949 = vmatprep.subr.mxu0 0.0
    %950 = vmatpush2.msra.mxu0 0.0
    %951 = vmatprep.subr.mxu0 0.0
    %952 = vmatpush2.msra.mxu0 0.0
    %953 = vmatprep.subr.mxu0 0.0
    %954 = vmatpush2.msra.mxu0 0.0
    %955 = vmatprep.subr.mxu0 0.0
    %956 = vmatpush2.msra.mxu0 0.0
    %957 = vmatprep.subr.mxu0 0.0
    %958 = vmatpush2.msra.mxu0 0.0
    %959 = vmatprep.subr.mxu0 0.0
    %960 = vmatpush2.msra.mxu0 0.0
    %961 = vmatprep.subr.mxu0 0.0
    %962 = vmatpush2.msra.mxu0 0.0
    %963 = vmatprep.subr.mxu0 0.0
    %964 = vmatpush2.msra.mxu0 0.0
    %965 = vmatprep.subr.mxu0 0.0
    %966 = vmatpush2.msra.mxu0 0.0
    %967 = vmatprep.mubr.f32.mxu0 0.0
    %968 = vmatmul.mubr.f32.gmra.mxu0 %v901
    %v969 = vpop.f32.mrf.mxu0
    %v970 = vadd.f32 0.0, %v969
    %v971 = vpop.f32.mrf.mxu0
    %v972 = vadd.f32 0.0, %v971
    %973 = vdwg.mxu0
    %v974 = vadd.f32 %v898, %v970
    %v975 = vadd.f32 %v899, %v972
    %v976 = vxor.u32 %v974, 2147483648
    %v977 = vmul.f32 %v976, 1.442695
    %v978 = vpow.pop %v977
    %v979 = vadd.f32 %v978, 1.0
    %v980 = vrcp.pop %v979
    %v981 = vmul.f32 1.0, %v980
    %v982 = vxor.u32 %v975, 2147483648
    %v983 = vmul.f32 %v982, 1.442695
    %v984 = vpow.pop %v983
    %v985 = vadd.f32 %v984, 1.0
    %v986 = vrcp.pop %v985
    %v987 = vmul.f32 1.0, %v986
    %v988 = vtanh.pop %v975
    %v989 = vmul.f32 %v981, %v891
    %991 = vrot.lane.b32.xlu0 %v988, 64
    %v992 = vpop.permute.xlu0 %991
    %v994 = vmul.f32 %v981, %v992
    %996 = vrot.lane.b32.xlu0 %v994, 64
    %v997 = vpop.permute.xlu0 %996
    %v999 = vadd.f32 %v989, %v997
    %v1000 = vtanh.pop %v999
    %1002 = vrot.lane.b32.xlu0 %v1000, 64
    %v1003 = vpop.permute.xlu0 %1002
    %v1005 = vmul.f32 %v987, %v1003
    %v1006 = vld [vmem:[#allocation2 + $0x70] sm:$0xff]
    %v1007 = vld [vmem:[#allocation2 + $0x78] sm:$0xff]
    %v1009 = vsel %vm251, %v1005, 0
    %1011 = vmatprep.subr.mxu0 0.0
    %1012 = vmatpush1.msra.mxu0 0.0
    %1013 = vmatprep.subr.mxu0 0.0
    %1014 = vmatpush1.msra.mxu0 0.0
    %1015 = vmatprep.subr.mxu0 0.0
    %1016 = vmatpush1.msra.mxu0 0.0
    %1017 = vmatprep.subr.mxu0 0.0
    %1018 = vmatpush1.msra.mxu0 0.0
    %1019 = vmatprep.subr.mxu0 0.0
    %1020 = vmatpush1.msra.mxu0 0.0
    %1021 = vmatprep.subr.mxu0 0.0
    %1022 = vmatpush1.msra.mxu0 0.0
    %1023 = vmatprep.subr.mxu0 0.0
    %1024 = vmatpush1.msra.mxu0 0.0
    %1025 = vmatprep.subr.mxu0 0.0
    %1026 = vmatpush1.msra.mxu0 0.0
    %1027 = vmatprep.subr.mxu0 %v250
    %1028 = vmatpush1.msra.mxu0 %v249
    %1029 = vmatprep.subr.mxu0 %v248
    %1030 = vmatpush1.msra.mxu0 %v247
    %1031 = vmatprep.subr.mxu0 %v246
    %1032 = vmatpush1.msra.mxu0 %v245
    %1033 = vmatprep.subr.mxu0 %v244
    %1034 = vmatpush1.msra.mxu0 %v243
    %1035 = vmatprep.subr.mxu0 %v242
    %1036 = vmatpush1.msra.mxu0 %v241
    %1037 = vmatprep.subr.mxu0 %v240
    %1038 = vmatpush1.msra.mxu0 %v239
    %1039 = vmatprep.subr.mxu0 %v238
    %1040 = vmatpush1.msra.mxu0 %v237
    %1041 = vmatprep.subr.mxu0 %v236
    %1042 = vmatpush1.msra.mxu0 %v235
    %1043 = vmatprep.subr.mxu0 0.0
    %1044 = vmatpush2.msra.mxu0 0.0
    %1045 = vmatprep.subr.mxu0 0.0
    %1046 = vmatpush2.msra.mxu0 0.0
    %1047 = vmatprep.subr.mxu0 0.0
    %1048 = vmatpush2.msra.mxu0 0.0
    %1049 = vmatprep.subr.mxu0 0.0
    %1050 = vmatpush2.msra.mxu0 0.0
    %1051 = vmatprep.subr.mxu0 0.0
    %1052 = vmatpush2.msra.mxu0 0.0
    %1053 = vmatprep.subr.mxu0 0.0
    %1054 = vmatpush2.msra.mxu0 0.0
    %1055 = vmatprep.subr.mxu0 0.0
    %1056 = vmatpush2.msra.mxu0 0.0
    %1057 = vmatprep.subr.mxu0 0.0
    %1058 = vmatpush2.msra.mxu0 0.0
    %1059 = vmatprep.subr.mxu0 0.0
    %1060 = vmatpush2.msra.mxu0 0.0
    %1061 = vmatprep.subr.mxu0 0.0
    %1062 = vmatpush2.msra.mxu0 0.0
    %1063 = vmatprep.subr.mxu0 0.0
    %1064 = vmatpush2.msra.mxu0 0.0
    %1065 = vmatprep.subr.mxu0 0.0
    %1066 = vmatpush2.msra.mxu0 0.0
    %1067 = vmatprep.subr.mxu0 0.0
    %1068 = vmatpush2.msra.mxu0 0.0
    %1069 = vmatprep.subr.mxu0 0.0
    %1070 = vmatpush2.msra.mxu0 0.0
    %1071 = vmatprep.subr.mxu0 0.0
    %1072 = vmatpush2.msra.mxu0 0.0
    %1073 = vmatprep.subr.mxu0 0.0
    %1074 = vmatpush2.msra.mxu0 0.0
    %1075 = vmatprep.mubr.f32.mxu0 0.0
    %1076 = vmatmul.mubr.f32.gmra.mxu0 %v1009
    %v1077 = vpop.f32.mrf.mxu0
    %v1078 = vadd.f32 0.0, %v1077
    %v1079 = vpop.f32.mrf.mxu0
    %v1080 = vadd.f32 0.0, %v1079
    %1081 = vdwg.mxu0
    %v1082 = vadd.f32 %v1006, %v1078
    %v1083 = vadd.f32 %v1007, %v1080
    %v1084 = vxor.u32 %v1082, 2147483648
    %v1085 = vmul.f32 %v1084, 1.442695
    %v1086 = vpow.pop %v1085
    %v1087 = vadd.f32 %v1086, 1.0
    %v1088 = vrcp.pop %v1087
    %v1089 = vmul.f32 1.0, %v1088
    %v1090 = vxor.u32 %v1083, 2147483648
    %v1091 = vmul.f32 %v1090, 1.442695
    %v1092 = vpow.pop %v1091
    %v1093 = vadd.f32 %v1092, 1.0
    %v1094 = vrcp.pop %v1093
    %v1095 = vmul.f32 1.0, %v1094
    %v1096 = vtanh.pop %v1083
    %v1097 = vmul.f32 %v1089, %v999
    %1099 = vrot.lane.b32.xlu0 %v1096, 64
    %v1100 = vpop.permute.xlu0 %1099
    %v1102 = vmul.f32 %v1089, %v1100
    %1104 = vrot.lane.b32.xlu0 %v1102, 64
    %v1105 = vpop.permute.xlu0 %1104
    %v1107 = vadd.f32 %v1097, %v1105
    %v1108 = vtanh.pop %v1107
    %1110 = vrot.lane.b32.xlu0 %v1108, 64
    %v1111 = vpop.permute.xlu0 %1110
    %v1113 = vmul.f32 %v1095, %v1111
    %v1114 = vld [vmem:[#allocation5] sm:$0xff]
    %v1115 = vld [vmem:[#allocation5 + $0x8] sm:$0xff]
    %v1116 = vld [vmem:[#allocation5 + $0x10] sm:$0xff]
    %v1117 = vld [vmem:[#allocation5 + $0x18] sm:$0xff]
    %v1118 = vld [vmem:[#allocation5 + $0x20] sm:$0xff]
    %v1119 = vld [vmem:[#allocation5 + $0x28] sm:$0xff]
    %v1120 = vld [vmem:[#allocation5 + $0x30] sm:$0xff]
    %v1121 = vld [vmem:[#allocation5 + $0x38] sm:$0xff]
    %v1122 = vld [vmem:[%s5] sm:$0x1]
    %v1124 = vlaneseq
    %v1125 = vshrl.u32 %v1124, 7
    %v1126 = vsub.s32 0, %v1125
    %v1127 = vrot.slane %v1122, %v1126
    %v1130 = vsel %vm251, %v1113, 0
    %1132 = vmatprep.subr.mxu0 0.0
    %1133 = vmatpush1.msra.mxu0 0.0
    %1134 = vmatprep.subr.mxu0 0.0
    %1135 = vmatpush1.msra.mxu0 0.0
    %1136 = vmatprep.subr.mxu0 0.0
    %1137 = vmatpush1.msra.mxu0 0.0
    %1138 = vmatprep.subr.mxu0 0.0
    %1139 = vmatpush1.msra.mxu0 0.0
    %1140 = vmatprep.subr.mxu0 0.0
    %1141 = vmatpush1.msra.mxu0 0.0
    %1142 = vmatprep.subr.mxu0 0.0
    %1143 = vmatpush1.msra.mxu0 0.0
    %1144 = vmatprep.subr.mxu0 0.0
    %1145 = vmatpush1.msra.mxu0 0.0
    %1146 = vmatprep.subr.mxu0 0.0
    %1147 = vmatpush1.msra.mxu0 0.0
    %1148 = vmatprep.subr.mxu0 0.0
    %1149 = vmatpush1.msra.mxu0 %v1121
    %1150 = vmatprep.subr.mxu0 0.0
    %1151 = vmatpush1.msra.mxu0 %v1120
    %1152 = vmatprep.subr.mxu0 0.0
    %1153 = vmatpush1.msra.mxu0 %v1119
    %1154 = vmatprep.subr.mxu0 0.0
    %1155 = vmatpush1.msra.mxu0 %v1118
    %1156 = vmatprep.subr.mxu0 0.0
    %1157 = vmatpush1.msra.mxu0 %v1117
    %1158 = vmatprep.subr.mxu0 0.0
    %1159 = vmatpush1.msra.mxu0 %v1116
    %1160 = vmatprep.subr.mxu0 0.0
    %1161 = vmatpush1.msra.mxu0 %v1115
    %1162 = vmatprep.subr.mxu0 0.0
    %1163 = vmatpush1.msra.mxu0 %v1114
    %1164 = vmatprep.subr.mxu0 0.0
    %1165 = vmatpush2.msra.mxu0 0.0
    %1166 = vmatprep.subr.mxu0 0.0
    %1167 = vmatpush2.msra.mxu0 0.0
    %1168 = vmatprep.subr.mxu0 0.0
    %1169 = vmatpush2.msra.mxu0 0.0
    %1170 = vmatprep.subr.mxu0 0.0
    %1171 = vmatpush2.msra.mxu0 0.0
    %1172 = vmatprep.subr.mxu0 0.0
    %1173 = vmatpush2.msra.mxu0 0.0
    %1174 = vmatprep.subr.mxu0 0.0
    %1175 = vmatpush2.msra.mxu0 0.0
    %1176 = vmatprep.subr.mxu0 0.0
    %1177 = vmatpush2.msra.mxu0 0.0
    %1178 = vmatprep.subr.mxu0 0.0
    %1179 = vmatpush2.msra.mxu0 0.0
    %1180 = vmatprep.subr.mxu0 0.0
    %1181 = vmatpush2.msra.mxu0 0.0
    %1182 = vmatprep.subr.mxu0 0.0
    %1183 = vmatpush2.msra.mxu0 0.0
    %1184 = vmatprep.subr.mxu0 0.0
    %1185 = vmatpush2.msra.mxu0 0.0
    %1186 = vmatprep.subr.mxu0 0.0
    %1187 = vmatpush2.msra.mxu0 0.0
    %1188 = vmatprep.subr.mxu0 0.0
    %1189 = vmatpush2.msra.mxu0 0.0
    %1190 = vmatprep.subr.mxu0 0.0
    %1191 = vmatpush2.msra.mxu0 0.0
    %1192 = vmatprep.subr.mxu0 0.0
    %1193 = vmatpush2.msra.mxu0 0.0
    %1194 = vmatprep.subr.mxu0 0.0
    %1195 = vmatpush2.msra.mxu0 0.0
    %1196 = vmatprep.mubr.f32.mxu0 0.0
    %1197 = vmatmul.mubr.f32.gmra.mxu0 %v1130
    %v1198 = vpop.f32.mrf.mxu0
    %v1199 = vadd.f32 %v1127, %v1198
    %v1200 = vpop.f32.mrf.mxu0
    %1201 = vdwg.mxu0
    %1202 = vst [vmem:[%s6] sm:$0xff] %v1199
    // Predicated region
    $region34: #{emotion_lstm_forward.1} parent=1 // pred_check
      _
    $region35: #{emotion_lstm_forward.1} parent=1 // pred_check_branch
      %1204 = sbr.rel (0) target = $region37
    $region36: #{emotion_lstm_forward.1} parent=1 // pred_region
      _
    $region37: #{emotion_lstm_forward.1} parent=1 // pred_fallthru
      _
    // Predicated region
    $region38: #{emotion_lstm_forward.1} parent=1 // pred_check
      _
    $region39: #{emotion_lstm_forward.1} parent=1 // pred_check_branch
      %1206 = sbr.rel (0) target = $region41
    $region40: #{emotion_lstm_forward.1} parent=1 // pred_region
      _
    $region41: #{emotion_lstm_forward.1} parent=1 // pred_fallthru
      _
    %1207 = vsyncpa [#allocation4], 1
    %1208 = vsyncpa [#allocation6], 1

</llo_original>
